<compile_context>
chip_gen: v7x
topology: tpu7x:2x2x1
jax: 0.10.0
libtpu: 0.0.40
codegen_flags: <defaults>
</compile_context>

<pallas_src>
import functools

import jax
import jax.numpy as jnp
from jax import lax
from jax.experimental import pallas as pl
from jax.experimental.pallas import tpu as pltpu


def _round_up(x, m):
    return -(-x // m) * m


# ----------------------------------------------------------------------------
# Kernel
# ----------------------------------------------------------------------------
def _vae_kernel(x_ref, w_ref, b_ref, out_ref, *, L, woffs, boffs):
    f32 = jnp.float32
    a = x_ref[...].astype(f32)            # (N, W): rows = (whole sequences)*L
    N = a.shape[0]

    # Sequence-boundary masks (rows are whole sequences stacked, N % L == 0).
    ridx = lax.broadcasted_iota(jnp.int32, (N, 1), 0)
    not_first = (ridx % L) != 0           # row has a predecessor in its sequence
    not_last = (ridx % L) != (L - 1)      # row has a successor in its sequence

    def taps(v):
        # [v_{l-1} | v_l | v_{l+1}] with zero padding at sequence boundaries.
        # Shifts ride the XLU (roll) + VPU (select); concat of three full
        # 128-lane slabs is pure vreg placement, no relayout copies.
        vp = jnp.where(not_first, pltpu.roll(v, 1, axis=0), 0.0)
        vn = jnp.where(not_last, pltpu.roll(v, N - 1, axis=0), 0.0)
        return jnp.concatenate([vp, v, vn], axis=1)          # (N, 3W)

    def dense(v, i):                      # folded stage i: v @ W_i + b_i
        r0, nr = woffs[i]                 # static, 128-row aligned
        w = w_ref[r0:r0 + nr, :]          # full lane width — no column slice
        b = b_ref[boffs[i]:boffs[i] + 1, :]
        return jnp.dot(v.astype(w.dtype), w,
                       preferred_element_type=f32) + b

    # ---------------- encode ----------------
    h = jnp.maximum(dense(taps(a), 0), 0.0)   # Depth_Conv1 + BN1 + ReLU (folded)
    h = jnp.maximum(dense(taps(h), 1), 0.0)   # Depth_Conv2 + BN2 + ReLU (folded)
    mulv = dense(h, 2)                        # fc21|fc22 fused; mu at lanes
                                              # [E:E+M), logvar at [E+M:E+2M)

    # --------- reparameterize (eval: z = mu) + decode ---------
    # fc3's weight rows are zero except the mu lanes, so no slice is needed.
    g = jnp.maximum(dense(mulv, 3), 0.0)      # fc3 + ReLU
    h = jnp.maximum(dense(taps(g), 4), 0.0)   # Depth_TranseConv3 + BN3 + ReLU
    recon = dense(taps(h), 5)                 # Depth_TranseConv4 -> lanes [0:E)

    # Single lane-dense output slab: recon occupies [0:E), mulv occupies
    # [E:E+2M); all other lanes of both terms are exactly zero.
    out_ref[...] = (recon + mulv).astype(out_ref.dtype)


# ----------------------------------------------------------------------------
# Host-side weight folding / packing (all lanes padded to width W)
# ----------------------------------------------------------------------------
def _fold_and_pack(params, E, M, W):
    (c1dw_w, c1dw_b, c1pw_w, c1pw_b, bn1_s, bn1_o,
     c2dw_w, c2dw_b, c2pw_w, c2pw_b, bn2_s, bn2_o,
     fc21_w, fc21_b, fc22_w, fc22_b, fc3_w, fc3_b,
     c3dt_w, c3dt_b, c3pt_w, c3pt_b, bn3_s, bn3_o,
     c4dt_w, c4dt_b, c4pt_w, c4pt_b) = params

    def fold_conv(dw_w, dw_b, pw_w, pw_b, s=None, o=None):
        # depthwise taps dw_w: (3, 1, C); pointwise pw_w: (C, Cout)
        # (a_prev*w0 + a*w1 + a_next*w2 + b_dw) @ P + b_pw, BN folded in.
        w0, w1, w2 = dw_w[0, 0], dw_w[1, 0], dw_w[2, 0]
        Wf = jnp.concatenate([w0[:, None] * pw_w,
                              w1[:, None] * pw_w,
                              w2[:, None] * pw_w], axis=0)    # (3C, Cout)
        b = dw_b @ pw_w + pw_b                                # (1, Cout)
        if s is not None:
            Wf, b = Wf * s, b * s + o
        return Wf, b

    def fold_tconv(dt_w, dt_b, pt_w, pt_b, s=None, o=None):
        # ConvTranspose1d(k=3,pad=1): a_next @ w0 + a @ w1 + a_prev @ w2 + b,
        # then pointwise tconv (k=1) @ pt_w + pt_b; taps order [a_prev|a|a_next].
        Wf = jnp.concatenate([dt_w[2] @ pt_w,
                              dt_w[1] @ pt_w,
                              dt_w[0] @ pt_w], axis=0)        # (3Cin, Cout)
        b = dt_b @ pt_w + pt_b
        if s is not None:
            Wf, b = Wf * s, b * s + o
        return Wf, b

    # Padding helpers: place real weights inside W-wide zero slabs.
    def pad_taps(Wf, cin, cout, col0=0):          # (3*cin, cout) -> (3W, W)
        out = jnp.zeros((3 * W, W), jnp.float32)
        for t in range(3):
            out = out.at[t * W:t * W + cin, col0:col0 + cout].set(
                Wf[t * cin:(t + 1) * cin])
        return out

    def pad_mat(Wf, cin, cout, row0=0, col0=0):   # (cin, cout) -> (W, W)
        return jnp.zeros((W, W), jnp.float32).at[
            row0:row0 + cin, col0:col0 + cout].set(Wf)

    def pad_bias(b, c, col0=0):                   # (1, c) -> (1, W)
        return jnp.zeros((1, W), jnp.float32).at[:, col0:col0 + c].set(b)

    W1f, b1f = fold_conv(c1dw_w, c1dw_b, c1pw_w, c1pw_b, bn1_s, bn1_o)
    W2f, b2f = fold_conv(c2dw_w, c2dw_b, c2pw_w, c2pw_b, bn2_s, bn2_o)
    W5f, b5f = fold_tconv(c3dt_w, c3dt_b, c3pt_w, c3pt_b, bn3_s, bn3_o)
    W6f, b6f = fold_tconv(c4dt_w, c4dt_b, c4pt_w, c4pt_b)

    mats = [
        pad_taps(W1f, E, M),                                   # 0: conv1+bn1
        pad_taps(W2f, M, M),                                   # 1: conv2+bn2
        # 2: fc21|fc22 -> mu at lanes [E:E+M), logvar at [E+M:E+2M)
        pad_mat(fc21_w, M, M, row0=0, col0=E)
        + pad_mat(fc22_w, M, M, row0=0, col0=E + M),
        # 3: fc3, reading the mu lanes of the mulv slab (eval: z = mu)
        pad_mat(fc3_w, M, M, row0=E, col0=0),
        pad_taps(W5f, M, M),                                   # 4: tconv3+bn3
        pad_taps(W6f, M, E),                                   # 5: tconv4 -> [0:E)
    ]
    biases = [
        pad_bias(b1f, M),
        pad_bias(b2f, M),
        pad_bias(fc21_b, M, col0=E) + pad_bias(fc22_b, M, col0=E + M),
        pad_bias(fc3_b, M),
        pad_bias(b5f, M),
        pad_bias(b6f, E),
    ]

    woffs, row = [], 0
    for m in mats:
        woffs.append((row, int(m.shape[0])))      # offsets are multiples of W
        row += int(m.shape[0])
    wpack = jnp.concatenate(mats, axis=0)         # (14W, W)

    bpack = jnp.zeros((8 * len(biases), W), jnp.float32)
    boffs = []
    for i, b in enumerate(biases):
        boffs.append(i * 8)                       # 8-row aligned
        bpack = bpack.at[i * 8:i * 8 + 1, :].set(b)

    return wpack, tuple(woffs), bpack, tuple(boffs)


# ----------------------------------------------------------------------------
# Wrapper
# ----------------------------------------------------------------------------
def _pick_num_blocks(B, L, W):
    """Whole batch in one block when it fits; otherwise whole-sequence tiles.

    Blocks always contain whole sequences (rows % L == 0) and respect the
    (8, 128) block constraint.  The budget is conservative so the same choice
    is safe on v7x (~half the VMEM of v5e/v6e).
    """
    vmem_budget = 8 * 1024 * 1024
    bytes_per_row = W * 4 * 16            # x/out blocks + taps/activation f32 temps
    max_rows = max(L, vmem_budget // bytes_per_row)
    if B * L <= max_rows:
        return 1
    for nb in range(2, B + 1):
        rows = (B // nb) * L
        if B % nb == 0 and rows % 8 == 0 and rows <= max_rows:
            return nb
    return 1


def vae_forward(x, params, *, compute_dtype=jnp.float32, num_blocks=None):
    """Runs the VAE forward pass. Returns (recon, mu, logvar).

    compute_dtype=jnp.bfloat16 halves HBM/VMEM traffic for x and the packed
    weights (recommended on v6e/v7x); MXU accumulation stays f32.
    """
    B, L, E = x.shape
    M = params[4].shape[1]                # bn1 scale is (1, M)
    N = B * L
    W = _round_up(E + 2 * M, 128)         # uniform 128-lane internal width

    wpack, woffs, bpack, boffs = _fold_and_pack(params, E, M, W)
    wpack = wpack.astype(compute_dtype)

    if num_blocks is None:
        # Default 1 on single-TC chips (v5e/v6e); row tiling only kicks in for
        # large B*L.  On v7x with large batches, pass num_blocks explicitly and
        # consider CORE_PARALLEL / core_map to shard row blocks across the two
        # TensorCores.
        num_blocks = _pick_num_blocks(B, L, W)
    rows = N // num_blocks                # multiple of L (whole sequences)

    # Lane-pad the input once host-side (zeros in lanes [E:W) stay zero
    # through every folded stage).
    x2 = x.reshape(N, E).astype(compute_dtype)
    xp = jnp.zeros((N, W), compute_dtype).at[:, :E].set(x2)

    kernel = functools.partial(_vae_kernel, L=L, woffs=woffs, boffs=boffs)

    out_slab = pl.pallas_call(
        kernel,
        grid=(num_blocks,),
        in_specs=[
            pl.BlockSpec((rows, W), lambda i: (i, 0)),
            pl.BlockSpec(wpack.shape, lambda i: (0, 0)),   # resident weights
            pl.BlockSpec(bpack.shape, lambda i: (0, 0)),   # resident biases
        ],
        out_specs=pl.BlockSpec((rows, W), lambda i: (i, 0)),
        out_shape=jax.ShapeDtypeStruct((N, W), jnp.float32),
        compiler_params=pltpu.CompilerParams(
            dimension_semantics=("parallel",),
            vmem_limit_bytes=32 * 1024 * 1024,
        ),
    )(xp, wpack, bpack)

    out = out_slab[:, :E].reshape(B, L, E)
    mu = out_slab[:, E:E + M].reshape(B, L, M)
    logvar = out_slab[:, E + M:E + 2 * M].reshape(B, L, M)
    return out, mu, logvar


# ----------------------------------------------------------------------------
# Parameter init (PyTorch-layout-ish) and pure-JAX reference
# ----------------------------------------------------------------------------
def init_params(key, d_word, d_model):
    ks = iter(jax.random.split(key, 64))
    E, M = d_word, d_model

    def nrm(shape, scale=0.1):
        return scale * jax.random.normal(next(ks), shape, jnp.float32)

    def bn(c):
        gamma = 1.0 + nrm((c,))
        beta = nrm((c,))
        mean = nrm((c,))
        var = jax.random.uniform(next(ks), (c,), jnp.float32, 0.5, 1.5)
        scale = gamma / jnp.sqrt(var + 1e-5)
        shift = beta - mean * scale
        return scale.reshape(1, c), shift.reshape(1, c)

    # Depth_Conv(E, M): Conv1d(E,E,3,groups=E,pad=1) then Conv1d(E,M,1)
    c1dw_w = jnp.transpose(nrm((E, 1, 3)), (2, 1, 0))      # (3,1,E)
    c1dw_b = nrm((E,)).reshape(1, E)
    c1pw_w = nrm((M, E, 1))[:, :, 0].T                     # (E,M)
    c1pw_b = nrm((M,)).reshape(1, M)
    bn1_s, bn1_o = bn(M)
    # Depth_Conv(M, M)
    c2dw_w = jnp.transpose(nrm((M, 1, 3)), (2, 1, 0))
    c2dw_b = nrm((M,)).reshape(1, M)
    c2pw_w = nrm((M, M, 1))[:, :, 0].T
    c2pw_b = nrm((M,)).reshape(1, M)
    bn2_s, bn2_o = bn(M)
    # Linears (PyTorch (out,in) -> kernel (in,out))
    fc21_w = nrm((M, M)).T
    fc21_b = nrm((M,)).reshape(1, M)
    fc22_w = nrm((M, M)).T
    fc22_b = nrm((M,)).reshape(1, M)
    fc3_w = nrm((M, M)).T
    fc3_b = nrm((M,)).reshape(1, M)
    # Depth_TranseConv(M, M): ConvTranspose1d(M,M,3,pad=1) then ConvTranspose1d(M,M,1)
    c3dt_w = jnp.transpose(nrm((M, M, 3)), (2, 0, 1))      # (3,in,out)
    c3dt_b = nrm((M,)).reshape(1, M)
    c3pt_w = nrm((M, M, 1))[:, :, 0]                       # (in,out)
    c3pt_b = nrm((M,)).reshape(1, M)
    bn3_s, bn3_o = bn(M)
    # Depth_TranseConv(M, E)
    c4dt_w = jnp.transpose(nrm((M, E, 3)), (2, 0, 1))      # (3,M,E)
    c4dt_b = nrm((E,)).reshape(1, E)
    c4pt_w = nrm((E, E, 1))[:, :, 0]
    c4pt_b = nrm((E,)).reshape(1, E)

    return [c1dw_w, c1dw_b, c1pw_w, c1pw_b, bn1_s, bn1_o,
            c2dw_w, c2dw_b, c2pw_w, c2pw_b, bn2_s, bn2_o,
            fc21_w, fc21_b, fc22_w, fc22_b, fc3_w, fc3_b,
            c3dt_w, c3dt_b, c3pt_w, c3pt_b, bn3_s, bn3_o,
            c4dt_w, c4dt_b, c4pt_w, c4pt_b]


def vae_reference(x, params):
    (c1dw_w, c1dw_b, c1pw_w, c1pw_b, bn1_s, bn1_o,
     c2dw_w, c2dw_b, c2pw_w, c2pw_b, bn2_s, bn2_o,
     fc21_w, fc21_b, fc22_w, fc22_b, fc3_w, fc3_b,
     c3dt_w, c3dt_b, c3pt_w, c3pt_b, bn3_s, bn3_o,
     c4dt_w, c4dt_b, c4pt_w, c4pt_b) = params

    def shifts(a):
        z = jnp.zeros_like(a[:, :1])
        return (jnp.concatenate([z, a[:, :-1]], axis=1),
                jnp.concatenate([a[:, 1:], z], axis=1))

    def depthwise(a, w, b):
        ap, an = shifts(a)
        return ap * w[0] + a * w[1] + an * w[2] + b

    def matmul(a, w, b):
        return a @ w + b

    def bn_relu(a, s, o):
        return jnp.maximum(a * s + o, 0.0)

    def tconv3(a, w, b):
        ap, an = shifts(a)
        return an @ w[0] + a @ w[1] + ap @ w[2] + b

    h = bn_relu(matmul(depthwise(x, c1dw_w, c1dw_b), c1pw_w, c1pw_b), bn1_s, bn1_o)
    h = bn_relu(matmul(depthwise(h, c2dw_w, c2dw_b), c2pw_w, c2pw_b), bn2_s, bn2_o)
    mu = matmul(h, fc21_w, fc21_b)
    lv = matmul(h, fc22_w, fc22_b)
    g = jnp.maximum(matmul(mu, fc3_w, fc3_b), 0.0)
    h = matmul(tconv3(g, c3dt_w, c3dt_b), c3pt_w, c3pt_b)
    h = bn_relu(h, bn3_s, bn3_o)
    out = matmul(tconv3(h, c4dt_w, c4dt_b), c4pt_w, c4pt_b)
    return out, mu, lv


if __name__ == "__main__":
    B, L = 2, 16          # batch, sequence length
    E, M = 16, 32         # d_word (embed_size), d_model (hidden_size)
    key = jax.random.PRNGKey(0)
    kx, kp = jax.random.split(key)
    x = jax.random.normal(kx, (B, L, E), jnp.float32)
    params = init_params(kp, E, M)

    ref_out, ref_mu, ref_lv = vae_reference(x, params)

    # f32 path (tight check).
    out, mu, logvar = jax.block_until_ready(vae_forward(x, params))
    assert out.shape == (B, L, E) and mu.shape == (B, L, M) and logvar.shape == (B, L, M)
    assert jnp.allclose(out, ref_out, atol=1e-4, rtol=1e-4)
    assert jnp.allclose(mu, ref_mu, atol=1e-4, rtol=1e-4)
    assert jnp.allclose(logvar, ref_lv, atol=1e-4, rtol=1e-4)

    # bf16 streaming path (v6e/v7x recommendation): bf16 x/weights, f32
    # accumulation.  Loose tolerance vs the f32 reference.
    out16, mu16, lv16 = jax.block_until_ready(
        vae_forward(x, params, compute_dtype=jnp.bfloat16))
    assert jnp.allclose(out16, ref_out, atol=5e-2, rtol=5e-2)
    assert jnp.allclose(mu16, ref_mu, atol=5e-2, rtol=5e-2)
    assert jnp.allclose(lv16, ref_lv, atol=5e-2, rtol=5e-2)

    print("KERNEL_OK")
</pallas_src>

<mosaic_0001>
module attributes {stable_mosaic.version = 11 : i64} {
  func.func @_vae_kernel(%arg0: i32, %arg1: memref<32x128xf32, #tpu.memory_space<vmem>>, %arg2: memref<1792x128xf32, #tpu.memory_space<vmem>>, %arg3: memref<48x128xf32, #tpu.memory_space<vmem>>, %arg4: memref<32x128xf32, #tpu.memory_space<vmem>>) attributes {dimension_semantics = [#tpu.dimension_semantics<parallel>], iteration_bounds = array<i64: 1>, scalar_prefetch = 0 : i64, scratch_operands = 0 : i64, tpu.core_type = #tpu.core_type<tc>, window_params = [{transform_indices = @transform_0, window_bounds = array<i64: 32, 128>}, {pipeline_mode = #tpu.pipeline_mode<synchronous>, transform_indices = @transform_1, window_bounds = array<i64: 1792, 128>}, {pipeline_mode = #tpu.pipeline_mode<synchronous>, transform_indices = @transform_2, window_bounds = array<i64: 48, 128>}, {transform_indices = @transform_3, window_bounds = array<i64: 32, 128>}]} {
    %c0 = arith.constant 0 : index
    %c0_0 = arith.constant 0 : index
    %0 = vector.load %arg1[%c0, %c0_0] : memref<32x128xf32, #tpu.memory_space<vmem>>, vector<32x128xf32>
    %1 = tpu.iota {dimensions = array<i32: 0>} : vector<32x1xi32>
    %c16_i32 = arith.constant 16 : i32
    %c0_i32 = arith.constant 0 : i32
    %2 = arith.cmpi eq, %c16_i32, %c0_i32 : i32
    %c1_i32 = arith.constant 1 : i32
    %3 = arith.select %2, %c1_i32, %c16_i32 : i32
    %4 = vector.broadcast %3 : i32 to vector<32x1xi32>
    %5 = arith.remsi %1, %4 : vector<32x1xi32>
    %c0_i32_1 = arith.constant 0 : i32
    %6 = vector.broadcast %c0_i32_1 : i32 to vector<32x1xi32>
    %7 = arith.cmpi ne, %5, %6 : vector<32x1xi32>
    %c0_i32_2 = arith.constant 0 : i32
    %8 = vector.broadcast %c0_i32_2 : i32 to vector<32x1xi32>
    %9 = arith.cmpi slt, %5, %8 : vector<32x1xi32>
    %c0_i32_3 = arith.constant 0 : i32
    %10 = arith.cmpi slt, %3, %c0_i32_3 : i32
    %11 = vector.broadcast %10 : i1 to vector<32x1xi1>
    %12 = vector.broadcast %11 : vector<32x1xi1> to vector<32x1xi1>
    %13 = arith.xori %9, %12 : vector<32x1xi1>
    %14 = arith.andi %13, %7 : vector<32x1xi1>
    %15 = vector.broadcast %3 : i32 to vector<32x1xi32>
    %16 = arith.addi %5, %15 : vector<32x1xi32>
    %17 = arith.select %14, %16, %5 : vector<32x1xi1>, vector<32x1xi32>
    %c0_i32_4 = arith.constant 0 : i32
    %18 = vector.broadcast %c0_i32_4 : i32 to vector<32x1xi32>
    %19 = arith.cmpi ne, %17, %18 : vector<32x1xi32>
    %c16_i32_5 = arith.constant 16 : i32
    %c0_i32_6 = arith.constant 0 : i32
    %20 = arith.cmpi eq, %c16_i32_5, %c0_i32_6 : i32
    %c1_i32_7 = arith.constant 1 : i32
    %21 = arith.select %20, %c1_i32_7, %c16_i32_5 : i32
    %22 = vector.broadcast %21 : i32 to vector<32x1xi32>
    %23 = arith.remsi %1, %22 : vector<32x1xi32>
    %c0_i32_8 = arith.constant 0 : i32
    %24 = vector.broadcast %c0_i32_8 : i32 to vector<32x1xi32>
    %25 = arith.cmpi ne, %23, %24 : vector<32x1xi32>
    %c0_i32_9 = arith.constant 0 : i32
    %26 = vector.broadcast %c0_i32_9 : i32 to vector<32x1xi32>
    %27 = arith.cmpi slt, %23, %26 : vector<32x1xi32>
    %c0_i32_10 = arith.constant 0 : i32
    %28 = arith.cmpi slt, %21, %c0_i32_10 : i32
    %29 = vector.broadcast %28 : i1 to vector<32x1xi1>
    %30 = vector.broadcast %29 : vector<32x1xi1> to vector<32x1xi1>
    %31 = arith.xori %27, %30 : vector<32x1xi1>
    %32 = arith.andi %31, %25 : vector<32x1xi1>
    %33 = vector.broadcast %21 : i32 to vector<32x1xi32>
    %34 = arith.addi %23, %33 : vector<32x1xi32>
    %35 = arith.select %32, %34, %23 : vector<32x1xi1>, vector<32x1xi32>
    %c15_i32 = arith.constant 15 : i32
    %36 = vector.broadcast %c15_i32 : i32 to vector<32x1xi32>
    %37 = arith.cmpi ne, %35, %36 : vector<32x1xi32>
    %c1_i32_11 = arith.constant 1 : i32
    %38 = tpu.dynamic_rotate %0 by %c1_i32_11 dim 0 : vector<32x128xf32>, i32 -> vector<32x128xf32>
    %cst = arith.constant 0.000000e+00 : f32
    %39 = vector.shape_cast %19 : vector<32x1xi1> to vector<32x1xi1>
    %40 = vector.broadcast %39 : vector<32x1xi1> to vector<32x128xi1>
    %41 = vector.broadcast %cst : f32 to vector<32x128xf32>
    %42 = arith.select %40, %38, %41 : vector<32x128xi1>, vector<32x128xf32>
    %c31_i32 = arith.constant 31 : i32
    %43 = tpu.dynamic_rotate %0 by %c31_i32 dim 0 : vector<32x128xf32>, i32 -> vector<32x128xf32>
    %cst_12 = arith.constant 0.000000e+00 : f32
    %44 = vector.shape_cast %37 : vector<32x1xi1> to vector<32x1xi1>
    %45 = vector.broadcast %44 : vector<32x1xi1> to vector<32x128xi1>
    %46 = vector.broadcast %cst_12 : f32 to vector<32x128xf32>
    %47 = arith.select %45, %43, %46 : vector<32x128xi1>, vector<32x128xf32>
    %48 = tpu.concatenate %42, %0, %47 in 1 : vector<32x128xf32>, vector<32x128xf32>, vector<32x128xf32> -> vector<32x384xf32>
    %c0_13 = arith.constant 0 : index
    %c0_14 = arith.constant 0 : index
    %49 = vector.load %arg2[%c0_13, %c0_14] : memref<1792x128xf32, #tpu.memory_space<vmem>>, vector<384x128xf32>
    %c0_15 = arith.constant 0 : index
    %c0_16 = arith.constant 0 : index
    %50 = vector.load %arg3[%c0_15, %c0_16] : memref<48x128xf32, #tpu.memory_space<vmem>>, vector<1x128xf32>
    %cst_17 = arith.constant dense<0.000000e+00> : vector<32x128xf32>
    %51 = tpu.matmul %48, %49, %cst_17 {dimension_numbers = #tpu.dot_dimension_numbers<[1], [0], [0], [1], [0, 0, 1, 1], [], []>} : vector<32x384xf32>, vector<384x128xf32>, vector<32x128xf32> -> vector<32x128xf32>
    %52 = vector.broadcast %50 : vector<1x128xf32> to vector<32x128xf32>
    %53 = arith.addf %51, %52 : vector<32x128xf32>
    %cst_18 = arith.constant 0.000000e+00 : f32
    %54 = vector.broadcast %cst_18 : f32 to vector<32x128xf32>
    %55 = arith.maximumf %53, %54 : vector<32x128xf32>
    %c1_i32_19 = arith.constant 1 : i32
    %56 = tpu.dynamic_rotate %55 by %c1_i32_19 dim 0 : vector<32x128xf32>, i32 -> vector<32x128xf32>
    %cst_20 = arith.constant 0.000000e+00 : f32
    %57 = vector.shape_cast %19 : vector<32x1xi1> to vector<32x1xi1>
    %58 = vector.broadcast %57 : vector<32x1xi1> to vector<32x128xi1>
    %59 = vector.broadcast %cst_20 : f32 to vector<32x128xf32>
    %60 = arith.select %58, %56, %59 : vector<32x128xi1>, vector<32x128xf32>
    %c31_i32_21 = arith.constant 31 : i32
    %61 = tpu.dynamic_rotate %55 by %c31_i32_21 dim 0 : vector<32x128xf32>, i32 -> vector<32x128xf32>
    %cst_22 = arith.constant 0.000000e+00 : f32
    %62 = vector.shape_cast %37 : vector<32x1xi1> to vector<32x1xi1>
    %63 = vector.broadcast %62 : vector<32x1xi1> to vector<32x128xi1>
    %64 = vector.broadcast %cst_22 : f32 to vector<32x128xf32>
    %65 = arith.select %63, %61, %64 : vector<32x128xi1>, vector<32x128xf32>
    %66 = tpu.concatenate %60, %55, %65 in 1 : vector<32x128xf32>, vector<32x128xf32>, vector<32x128xf32> -> vector<32x384xf32>
    %c384 = arith.constant 384 : index
    %c0_23 = arith.constant 0 : index
    %67 = vector.load %arg2[%c384, %c0_23] : memref<1792x128xf32, #tpu.memory_space<vmem>>, vector<384x128xf32>
    %c8 = arith.constant 8 : index
    %c0_24 = arith.constant 0 : index
    %68 = vector.load %arg3[%c8, %c0_24] : memref<48x128xf32, #tpu.memory_space<vmem>>, vector<1x128xf32>
    %cst_25 = arith.constant dense<0.000000e+00> : vector<32x128xf32>
    %69 = tpu.matmul %66, %67, %cst_25 {dimension_numbers = #tpu.dot_dimension_numbers<[1], [0], [0], [1], [0, 0, 1, 1], [], []>} : vector<32x384xf32>, vector<384x128xf32>, vector<32x128xf32> -> vector<32x128xf32>
    %70 = vector.broadcast %68 : vector<1x128xf32> to vector<32x128xf32>
    %71 = arith.addf %69, %70 : vector<32x128xf32>
    %cst_26 = arith.constant 0.000000e+00 : f32
    %72 = vector.broadcast %cst_26 : f32 to vector<32x128xf32>
    %73 = arith.maximumf %71, %72 : vector<32x128xf32>
    %c768 = arith.constant 768 : index
    %c0_27 = arith.constant 0 : index
    %74 = vector.load %arg2[%c768, %c0_27] : memref<1792x128xf32, #tpu.memory_space<vmem>>, vector<128x128xf32>
    %c16 = arith.constant 16 : index
    %c0_28 = arith.constant 0 : index
    %75 = vector.load %arg3[%c16, %c0_28] : memref<48x128xf32, #tpu.memory_space<vmem>>, vector<1x128xf32>
    %cst_29 = arith.constant dense<0.000000e+00> : vector<32x128xf32>
    %76 = tpu.matmul %73, %74, %cst_29 {dimension_numbers = #tpu.dot_dimension_numbers<[1], [0], [0], [1], [0, 0, 1, 1], [], []>} : vector<32x128xf32>, vector<128x128xf32>, vector<32x128xf32> -> vector<32x128xf32>
    %77 = vector.broadcast %75 : vector<1x128xf32> to vector<32x128xf32>
    %78 = arith.addf %76, %77 : vector<32x128xf32>
    %c896 = arith.constant 896 : index
    %c0_30 = arith.constant 0 : index
    %79 = vector.load %arg2[%c896, %c0_30] : memref<1792x128xf32, #tpu.memory_space<vmem>>, vector<128x128xf32>
    %c24 = arith.constant 24 : index
    %c0_31 = arith.constant 0 : index
    %80 = vector.load %arg3[%c24, %c0_31] : memref<48x128xf32, #tpu.memory_space<vmem>>, vector<1x128xf32>
    %cst_32 = arith.constant dense<0.000000e+00> : vector<32x128xf32>
    %81 = tpu.matmul %78, %79, %cst_32 {dimension_numbers = #tpu.dot_dimension_numbers<[1], [0], [0], [1], [0, 0, 1, 1], [], []>} : vector<32x128xf32>, vector<128x128xf32>, vector<32x128xf32> -> vector<32x128xf32>
    %82 = vector.broadcast %80 : vector<1x128xf32> to vector<32x128xf32>
    %83 = arith.addf %81, %82 : vector<32x128xf32>
    %cst_33 = arith.constant 0.000000e+00 : f32
    %84 = vector.broadcast %cst_33 : f32 to vector<32x128xf32>
    %85 = arith.maximumf %83, %84 : vector<32x128xf32>
    %c1_i32_34 = arith.constant 1 : i32
    %86 = tpu.dynamic_rotate %85 by %c1_i32_34 dim 0 : vector<32x128xf32>, i32 -> vector<32x128xf32>
    %cst_35 = arith.constant 0.000000e+00 : f32
    %87 = vector.shape_cast %19 : vector<32x1xi1> to vector<32x1xi1>
    %88 = vector.broadcast %87 : vector<32x1xi1> to vector<32x128xi1>
    %89 = vector.broadcast %cst_35 : f32 to vector<32x128xf32>
    %90 = arith.select %88, %86, %89 : vector<32x128xi1>, vector<32x128xf32>
    %c31_i32_36 = arith.constant 31 : i32
    %91 = tpu.dynamic_rotate %85 by %c31_i32_36 dim 0 : vector<32x128xf32>, i32 -> vector<32x128xf32>
    %cst_37 = arith.constant 0.000000e+00 : f32
    %92 = vector.shape_cast %37 : vector<32x1xi1> to vector<32x1xi1>
    %93 = vector.broadcast %92 : vector<32x1xi1> to vector<32x128xi1>
    %94 = vector.broadcast %cst_37 : f32 to vector<32x128xf32>
    %95 = arith.select %93, %91, %94 : vector<32x128xi1>, vector<32x128xf32>
    %96 = tpu.concatenate %90, %85, %95 in 1 : vector<32x128xf32>, vector<32x128xf32>, vector<32x128xf32> -> vector<32x384xf32>
    %c1024 = arith.constant 1024 : index
    %c0_38 = arith.constant 0 : index
    %97 = vector.load %arg2[%c1024, %c0_38] : memref<1792x128xf32, #tpu.memory_space<vmem>>, vector<384x128xf32>
    %c32 = arith.constant 32 : index
    %c0_39 = arith.constant 0 : index
    %98 = vector.load %arg3[%c32, %c0_39] : memref<48x128xf32, #tpu.memory_space<vmem>>, vector<1x128xf32>
    %cst_40 = arith.constant dense<0.000000e+00> : vector<32x128xf32>
    %99 = tpu.matmul %96, %97, %cst_40 {dimension_numbers = #tpu.dot_dimension_numbers<[1], [0], [0], [1], [0, 0, 1, 1], [], []>} : vector<32x384xf32>, vector<384x128xf32>, vector<32x128xf32> -> vector<32x128xf32>
    %100 = vector.broadcast %98 : vector<1x128xf32> to vector<32x128xf32>
    %101 = arith.addf %99, %100 : vector<32x128xf32>
    %cst_41 = arith.constant 0.000000e+00 : f32
    %102 = vector.broadcast %cst_41 : f32 to vector<32x128xf32>
    %103 = arith.maximumf %101, %102 : vector<32x128xf32>
    %c1_i32_42 = arith.constant 1 : i32
    %104 = tpu.dynamic_rotate %103 by %c1_i32_42 dim 0 : vector<32x128xf32>, i32 -> vector<32x128xf32>
    %cst_43 = arith.constant 0.000000e+00 : f32
    %105 = vector.shape_cast %19 : vector<32x1xi1> to vector<32x1xi1>
    %106 = vector.broadcast %105 : vector<32x1xi1> to vector<32x128xi1>
    %107 = vector.broadcast %cst_43 : f32 to vector<32x128xf32>
    %108 = arith.select %106, %104, %107 : vector<32x128xi1>, vector<32x128xf32>
    %c31_i32_44 = arith.constant 31 : i32
    %109 = tpu.dynamic_rotate %103 by %c31_i32_44 dim 0 : vector<32x128xf32>, i32 -> vector<32x128xf32>
    %cst_45 = arith.constant 0.000000e+00 : f32
    %110 = vector.shape_cast %37 : vector<32x1xi1> to vector<32x1xi1>
    %111 = vector.broadcast %110 : vector<32x1xi1> to vector<32x128xi1>
    %112 = vector.broadcast %cst_45 : f32 to vector<32x128xf32>
    %113 = arith.select %111, %109, %112 : vector<32x128xi1>, vector<32x128xf32>
    %114 = tpu.concatenate %108, %103, %113 in 1 : vector<32x128xf32>, vector<32x128xf32>, vector<32x128xf32> -> vector<32x384xf32>
    %c1408 = arith.constant 1408 : index
    %c0_46 = arith.constant 0 : index
    %115 = vector.load %arg2[%c1408, %c0_46] : memref<1792x128xf32, #tpu.memory_space<vmem>>, vector<384x128xf32>
    %c40 = arith.constant 40 : index
    %c0_47 = arith.constant 0 : index
    %116 = vector.load %arg3[%c40, %c0_47] : memref<48x128xf32, #tpu.memory_space<vmem>>, vector<1x128xf32>
    %cst_48 = arith.constant dense<0.000000e+00> : vector<32x128xf32>
    %117 = tpu.matmul %114, %115, %cst_48 {dimension_numbers = #tpu.dot_dimension_numbers<[1], [0], [0], [1], [0, 0, 1, 1], [], []>} : vector<32x384xf32>, vector<384x128xf32>, vector<32x128xf32> -> vector<32x128xf32>
    %118 = vector.broadcast %116 : vector<1x128xf32> to vector<32x128xf32>
    %119 = arith.addf %117, %118 : vector<32x128xf32>
    %120 = arith.addf %119, %78 : vector<32x128xf32>
    %c0_49 = arith.constant 0 : index
    %c0_50 = arith.constant 0 : index
    %121 = vector.load %arg4[%c0_49, %c0_50] : memref<32x128xf32, #tpu.memory_space<vmem>>, vector<32x128xf32>
    tpu.vector_store %arg4[%c0_49, %c0_50], %120 {strides = array<i32>} : memref<32x128xf32, #tpu.memory_space<vmem>>, vector<32x128xf32>,
    return
  }
  func.func @transform_0(%arg0: i32) -> (i32, i32) {
    %c0_i32 = arith.constant 0 : i32
    %c0_i32_0 = arith.constant 0 : i32
    return %arg0, %c0_i32 : i32, i32
  }
  func.func @transform_1(%arg0: i32) -> (i32, i32) {
    %c0_i32 = arith.constant 0 : i32
    %c0_i32_0 = arith.constant 0 : i32
    %c0_i32_1 = arith.constant 0 : i32
    return %c0_i32, %c0_i32_0 : i32, i32
  }
  func.func @transform_2(%arg0: i32) -> (i32, i32) {
    %c0_i32 = arith.constant 0 : i32
    %c0_i32_0 = arith.constant 0 : i32
    %c0_i32_1 = arith.constant 0 : i32
    return %c0_i32, %c0_i32_0 : i32, i32
  }
  func.func @transform_3(%arg0: i32) -> (i32, i32) {
    %c0_i32 = arith.constant 0 : i32
    %c0_i32_0 = arith.constant 0 : i32
    return %arg0, %c0_i32 : i32, i32
  }
}

</mosaic_0001>

<llo_original>
// kernel: tpu_custom_call.1
$region0: #{tpu_custom_call.1}
  #allocation0 [shape = 'u32[]', space=smem, size = 0x4, offset = 0x4, fixed_abs, tag = 'smem constant byte address 0x4 - core index']
  #allocation1 [shape = 'u32[144,128]{1,0:T(1,128)}', space=vmem, size = 0x12000, scoped, tag = 'internal scratch']
  %s0 = inlined_call_operand.hbm [shape: f32[32,128], index: 0, kind: input, shape index: {}]
  %s1 = inlined_call_operand.hbm [shape: f32[1792,128], index: 1, kind: input, shape index: {}]
  %s2 = inlined_call_operand.hbm [shape: f32[48,128], index: 2, kind: input, shape index: {}]
  %s3 = inlined_call_operand.hbm [shape: f32[32,128], index: 3, kind: output, shape index: {}]
  %s4 = sld [smem:[#allocation0]]
  $region34: #{tpu_custom_call.1} parent=0
    _
  %s6 = ssub.s32 1, %s4
  %s7 = scalar_select 0, %s6, %s4
  $region1: #{tpu_custom_call.1} parent=0
    #allocation2 [shape = 'u8[16384]{0}', space=vmem, size = 0x4000, scoped, tag = 'input window, operand 0, single buffered']
    #allocation3 [shape = 's32[1]{0}', space=sflag, size = 0x4, scoped, tag = 'scoped memory for tpu_custom_call.1']
    #allocation4 [shape = 's32[1]{0}', space=sflag, size = 0x4, scoped, tag = 'scoped memory for tpu_custom_call.1']
    #allocation5 [shape = 'u8[917504]{0}', space=vmem, size = 0xe0000, scoped, tag = 'input window, operand 1, single buffered']
    #allocation6 [shape = 's32[1]{0}', space=sflag, size = 0x4, scoped, tag = 'scoped memory for tpu_custom_call.1']
    #allocation7 [shape = 'u8[24576]{0}', space=vmem, size = 0x6000, scoped, tag = 'input window, operand 2, single buffered']
    #allocation8 [shape = 'u8[16384]{0}', space=vmem, size = 0x4000, scoped, tag = 'output window, operand 0, single buffered']
    %8 = vsyncpa [#allocation3], 0
    %9 = vsyncpa [#allocation6], 0
    %10 = vsyncpa [#allocation4], 0
    // Predicated region
    $region2: #{tpu_custom_call.1} parent=1 // pred_check
      _
    $region3: #{tpu_custom_call.1} parent=1 // pred_check_branch
      %12 = sbr.rel (0) target = $region5
    $region4: #{tpu_custom_call.1} parent=1 // pred_region
      %s14 = ssub.s32 512, 512
      %15 = vsyncadd [#allocation3], %s14
      %s16 = sshll.u32 [#allocation2], 4
      %s17 = int_to_ptr.vmem [resolvable:$true] %s16
      %22 = dma.hbm_to_vmem [thread:$0]  %s0, 512, %s17, [#allocation3], 128, 128, 8
    $region5: #{tpu_custom_call.1} parent=1 // pred_fallthru
      _
    // Predicated region
    $region6: #{tpu_custom_call.1} parent=1 // pred_check
      _
    $region7: #{tpu_custom_call.1} parent=1 // pred_check_branch
      %24 = sbr.rel (0) target = $region9
    $region8: #{tpu_custom_call.1} parent=1 // pred_region
      %s26 = ssub.s32 28672, 28672
      %27 = vsyncadd [#allocation6], %s26
      %s28 = sshll.u32 [#allocation5], 4
      %s29 = int_to_ptr.vmem [resolvable:$true] %s28
      %34 = dma.hbm_to_vmem [thread:$0]  %s1, 28672, %s29, [#allocation6], 128, 128, 8
    $region9: #{tpu_custom_call.1} parent=1 // pred_fallthru
      _
    // Predicated region
    $region10: #{tpu_custom_call.1} parent=1 // pred_check
      _
    $region11: #{tpu_custom_call.1} parent=1 // pred_check_branch
      %36 = sbr.rel (0) target = $region13
    $region12: #{tpu_custom_call.1} parent=1 // pred_region
      %s38 = ssub.s32 768, 768
      %39 = vsyncadd [#allocation6], %s38
      %s40 = sshll.u32 [#allocation7], 4
      %s41 = int_to_ptr.vmem [resolvable:$true] %s40
      %46 = dma.hbm_to_vmem [thread:$0]  %s2, 768, %s41, [#allocation6], 128, 128, 8
    $region13: #{tpu_custom_call.1} parent=1 // pred_fallthru
      _
    // Predicated region
    $region14: #{tpu_custom_call.1} parent=1 // pred_check
      _
    $region15: #{tpu_custom_call.1} parent=1 // pred_check_branch
      %48 = sbr.rel (0) target = $region17
    $region16: #{tpu_custom_call.1} parent=1 // pred_region
      %49 = dma.done [#allocation3], 512
    $region17: #{tpu_custom_call.1} parent=1 // pred_fallthru
      _
    // Predicated region
    $region18: #{tpu_custom_call.1} parent=1 // pred_check
      _
    $region19: #{tpu_custom_call.1} parent=1 // pred_check_branch
      %51 = sbr.rel (0) target = $region21
    $region20: #{tpu_custom_call.1} parent=1 // pred_region
      %52 = dma.done [#allocation6], 28672
    $region21: #{tpu_custom_call.1} parent=1 // pred_fallthru
      _
    // Predicated region
    $region22: #{tpu_custom_call.1} parent=1 // pred_check
      _
    $region23: #{tpu_custom_call.1} parent=1 // pred_check_branch
      %54 = sbr.rel (0) target = $region25
    $region24: #{tpu_custom_call.1} parent=1 // pred_region
      %55 = dma.done [#allocation6], 768
    $region25: #{tpu_custom_call.1} parent=1 // pred_fallthru
      _
    %v56 = vld [vmem:[#allocation2] sm:$0xff]
    %v57 = vld [vmem:[#allocation2 + $0x8] sm:$0xff]
    %v58 = vld [vmem:[#allocation2 + $0x10] sm:$0xff]
    %v59 = vld [vmem:[#allocation2 + $0x18] sm:$0xff]
    %v60 = vlaneseq
    %v61 = vshrl.u32 %v60, 7
    %v62 = vadd.s32 %v61, 8
    %v63 = vadd.s32 %v61, 16
    %v64 = vadd.s32 %v61, 24
    %vm65 = vcmp.lt.s32.totalorder %v61, 0
    %v66 = vsub.s32 0, %v61
    %v67 = vsel %vm65, %v66, %v61
    %v68 = vshrl.u32 %v67, 4
    %v69 = vand.u32 %v67, 15
    %v70 = vsub.s32 0, %v69
    %v71 = vsel %vm65, %v70, %v69
    %vm72 = vcmp.lt.s32.totalorder %v62, 0
    %v73 = vsub.s32 0, %v62
    %v74 = vsel %vm72, %v73, %v62
    %v75 = vshrl.u32 %v74, 4
    %v76 = vand.u32 %v74, 15
    %v77 = vsub.s32 0, %v76
    %v78 = vsel %vm72, %v77, %v76
    %vm79 = vcmp.lt.s32.totalorder %v63, 0
    %v80 = vsub.s32 0, %v63
    %v81 = vsel %vm79, %v80, %v63
    %v82 = vshrl.u32 %v81, 4
    %v83 = vand.u32 %v81, 15
    %v84 = vsub.s32 0, %v83
    %v85 = vsel %vm79, %v84, %v83
    %vm86 = vcmp.lt.s32.totalorder %v64, 0
    %v87 = vsub.s32 0, %v64
    %v88 = vsel %vm86, %v87, %v64
    %v89 = vshrl.u32 %v88, 4
    %v90 = vand.u32 %v88, 15
    %v91 = vsub.s32 0, %v90
    %v92 = vsel %vm86, %v91, %v90
    %vm93 = vcmp.ne.s32.totalorder %v71, 0
    %vm94 = vcmp.ne.s32.totalorder %v78, 0
    %vm95 = vcmp.ne.s32.totalorder %v85, 0
    %vm96 = vcmp.ne.s32.totalorder %v92, 0
    %vm97 = vcmp.lt.s32.totalorder %v71, 0
    %vm98 = vcmp.lt.s32.totalorder %v78, 0
    %vm99 = vcmp.lt.s32.totalorder %v85, 0
    %vm100 = vcmp.lt.s32.totalorder %v92, 0
    %vm101 = vmand %vm97, %vm93
    %vm102 = vmand %vm98, %vm94
    %vm103 = vmand %vm99, %vm95
    %vm104 = vmand %vm100, %vm96
    %v105 = vadd.s32 %v71, 16
    %v106 = vadd.s32 %v78, 16
    %v107 = vadd.s32 %v85, 16
    %v108 = vadd.s32 %v92, 16
    %v109 = vsel %vm101, %v105, %v71
    %v110 = vsel %vm102, %v106, %v78
    %v111 = vsel %vm103, %v107, %v85
    %v112 = vsel %vm104, %v108, %v92
    %vm113 = vcmp.ne.s32.totalorder %v109, 0
    %vm114 = vcmp.ne.s32.totalorder %v110, 0
    %vm115 = vcmp.ne.s32.totalorder %v111, 0
    %vm116 = vcmp.ne.s32.totalorder %v112, 0
    %vm117 = vcmp.ne.s32.totalorder %v109, 15
    %vm118 = vcmp.ne.s32.totalorder %v110, 15
    %vm119 = vcmp.ne.s32.totalorder %v111, 15
    %vm120 = vcmp.ne.s32.totalorder %v112, 15
    %v121 = vrot.slane %v56, 7
    %v122 = vrot.slane %v57, 7
    %v123 = vrot.slane %v58, 7
    %v124 = vrot.slane %v59, 7
    %vm125 = vcmp.lt.s32.totalorder %v61, 1
    %v126 = vsel %vm125, %v123, %v124
    %v127 = vsel %vm125, %v122, %v123
    %v128 = vsel %vm125, %v121, %v122
    %v129 = vsel %vm125, %v124, %v121
    %v130 = vsel %vm113, 1, 0
    %v131 = vsel %vm114, 1, 0
    %v132 = vsel %vm115, 1, 0
    %v133 = vsel %vm116, 1, 0
    %vm134 = vcmp.eq.s32.totalorder %v130, 1
    %vm135 = vcmp.eq.s32.totalorder %v131, 1
    %vm136 = vcmp.eq.s32.totalorder %v132, 1
    %vm137 = vcmp.eq.s32.totalorder %v133, 1
    %v138 = vsel %vm134, %v129, 0.0
    %v139 = vsel %vm135, %v128, 0.0
    %v140 = vsel %vm136, %v127, 0.0
    %v141 = vsel %vm137, %v126, 0.0
    %v142 = vrot.slane %v56, 1
    %v143 = vrot.slane %v57, 1
    %v144 = vrot.slane %v58, 1
    %v145 = vrot.slane %v59, 1
    %vm146 = vcmp.lt.s32.totalorder %v61, 7
    %v147 = vsel %vm146, %v144, %v145
    %v148 = vsel %vm146, %v143, %v144
    %v149 = vsel %vm146, %v142, %v143
    %v150 = vsel %vm146, %v145, %v142
    %v151 = vsel %vm117, 1, 0
    %v152 = vsel %vm118, 1, 0
    %v153 = vsel %vm119, 1, 0
    %v154 = vsel %vm120, 1, 0
    %vm155 = vcmp.eq.s32.totalorder %v151, 1
    %vm156 = vcmp.eq.s32.totalorder %v152, 1
    %vm157 = vcmp.eq.s32.totalorder %v153, 1
    %vm158 = vcmp.eq.s32.totalorder %v154, 1
    %v159 = vsel %vm155, %v149, 0.0
    %v160 = vsel %vm156, %v148, 0.0
    %v161 = vsel %vm157, %v147, 0.0
    %v162 = vsel %vm158, %v150, 0.0
    %v163 = vld [vmem:[#allocation5] sm:$0xff]
    %v164 = vld [vmem:[#allocation5 + $0x8] sm:$0xff]
    %v165 = vld [vmem:[#allocation5 + $0x10] sm:$0xff]
    %v166 = vld [vmem:[#allocation5 + $0x18] sm:$0xff]
    %v167 = vld [vmem:[#allocation5 + $0x20] sm:$0xff]
    %v168 = vld [vmem:[#allocation5 + $0x28] sm:$0xff]
    %v169 = vld [vmem:[#allocation5 + $0x30] sm:$0xff]
    %v170 = vld [vmem:[#allocation5 + $0x38] sm:$0xff]
    %v171 = vld [vmem:[#allocation5 + $0x40] sm:$0xff]
    %v172 = vld [vmem:[#allocation5 + $0x48] sm:$0xff]
    %v173 = vld [vmem:[#allocation5 + $0x50] sm:$0xff]
    %v174 = vld [vmem:[#allocation5 + $0x58] sm:$0xff]
    %v175 = vld [vmem:[#allocation5 + $0x60] sm:$0xff]
    %v176 = vld [vmem:[#allocation5 + $0x68] sm:$0xff]
    %v177 = vld [vmem:[#allocation5 + $0x70] sm:$0xff]
    %v178 = vld [vmem:[#allocation5 + $0x78] sm:$0xff]
    %v179 = vld [vmem:[#allocation5 + $0x80] sm:$0xff]
    %v180 = vld [vmem:[#allocation5 + $0x88] sm:$0xff]
    %v181 = vld [vmem:[#allocation5 + $0x90] sm:$0xff]
    %v182 = vld [vmem:[#allocation5 + $0x98] sm:$0xff]
    %v183 = vld [vmem:[#allocation5 + $0xa0] sm:$0xff]
    %v184 = vld [vmem:[#allocation5 + $0xa8] sm:$0xff]
    %v185 = vld [vmem:[#allocation5 + $0xb0] sm:$0xff]
    %v186 = vld [vmem:[#allocation5 + $0xb8] sm:$0xff]
    %v187 = vld [vmem:[#allocation5 + $0xc0] sm:$0xff]
    %v188 = vld [vmem:[#allocation5 + $0xc8] sm:$0xff]
    %v189 = vld [vmem:[#allocation5 + $0xd0] sm:$0xff]
    %v190 = vld [vmem:[#allocation5 + $0xd8] sm:$0xff]
    %v191 = vld [vmem:[#allocation5 + $0xe0] sm:$0xff]
    %v192 = vld [vmem:[#allocation5 + $0xe8] sm:$0xff]
    %v193 = vld [vmem:[#allocation5 + $0xf0] sm:$0xff]
    %v194 = vld [vmem:[#allocation5 + $0xf8] sm:$0xff]
    %v195 = vld [vmem:[#allocation5 + $0x100] sm:$0xff]
    %v196 = vld [vmem:[#allocation5 + $0x108] sm:$0xff]
    %v197 = vld [vmem:[#allocation5 + $0x110] sm:$0xff]
    %v198 = vld [vmem:[#allocation5 + $0x118] sm:$0xff]
    %v199 = vld [vmem:[#allocation5 + $0x120] sm:$0xff]
    %v200 = vld [vmem:[#allocation5 + $0x128] sm:$0xff]
    %v201 = vld [vmem:[#allocation5 + $0x130] sm:$0xff]
    %v202 = vld [vmem:[#allocation5 + $0x138] sm:$0xff]
    %v203 = vld [vmem:[#allocation5 + $0x140] sm:$0xff]
    %v204 = vld [vmem:[#allocation5 + $0x148] sm:$0xff]
    %v205 = vld [vmem:[#allocation5 + $0x150] sm:$0xff]
    %v206 = vld [vmem:[#allocation5 + $0x158] sm:$0xff]
    %v207 = vld [vmem:[#allocation5 + $0x160] sm:$0xff]
    %v208 = vld [vmem:[#allocation5 + $0x168] sm:$0xff]
    %v209 = vld [vmem:[#allocation5 + $0x170] sm:$0xff]
    %v210 = vld [vmem:[#allocation5 + $0x178] sm:$0xff]
    %v211 = vld [vmem:[#allocation7] sm:$0x1]
    %v212 = vlaneseq
    %v213 = vshrl.u32 %v212, 7
    %v214 = vsub.s32 0, %v213
    %v215 = vrot.slane %v211, %v214
    %216 = vmatprep.subr.mxu0 0.0
    %217 = vmatpush1.msra.mxu0 %v163
    %218 = vmatprep.subr.mxu0 0.0
    %219 = vmatpush1.msra.mxu0 %v164
    %220 = vmatprep.subr.mxu0 0.0
    %221 = vmatpush1.msra.mxu0 %v165
    %222 = vmatprep.subr.mxu0 0.0
    %223 = vmatpush1.msra.mxu0 %v166
    %224 = vmatprep.subr.mxu0 0.0
    %225 = vmatpush1.msra.mxu0 %v167
    %226 = vmatprep.subr.mxu0 0.0
    %227 = vmatpush1.msra.mxu0 %v168
    %228 = vmatprep.subr.mxu0 0.0
    %229 = vmatpush1.msra.mxu0 %v169
    %230 = vmatprep.subr.mxu0 0.0
    %231 = vmatpush1.msra.mxu0 %v170
    %232 = vmatprep.subr.mxu0 0.0
    %233 = vmatpush1.msra.mxu0 %v171
    %234 = vmatprep.subr.mxu0 0.0
    %235 = vmatpush1.msra.mxu0 %v172
    %236 = vmatprep.subr.mxu0 0.0
    %237 = vmatpush1.msra.mxu0 %v173
    %238 = vmatprep.subr.mxu0 0.0
    %239 = vmatpush1.msra.mxu0 %v174
    %240 = vmatprep.subr.mxu0 0.0
    %241 = vmatpush1.msra.mxu0 %v175
    %242 = vmatprep.subr.mxu0 0.0
    %243 = vmatpush1.msra.mxu0 %v176
    %244 = vmatprep.subr.mxu0 0.0
    %245 = vmatpush1.msra.mxu0 %v177
    %246 = vmatprep.subr.mxu0 0.0
    %247 = vmatpush1.msra.mxu0 %v178
    %248 = vmatprep.subr.mxu0 0.0
    %249 = vmatpush1.msra.mxu0 %v179
    %250 = vmatprep.subr.mxu0 0.0
    %251 = vmatpush1.msra.mxu0 %v180
    %252 = vmatprep.subr.mxu0 0.0
    %253 = vmatpush1.msra.mxu0 %v181
    %254 = vmatprep.subr.mxu0 0.0
    %255 = vmatpush1.msra.mxu0 %v182
    %256 = vmatprep.subr.mxu0 0.0
    %257 = vmatpush1.msra.mxu0 %v183
    %258 = vmatprep.subr.mxu0 0.0
    %259 = vmatpush1.msra.mxu0 %v184
    %260 = vmatprep.subr.mxu0 0.0
    %261 = vmatpush1.msra.mxu0 %v185
    %262 = vmatprep.subr.mxu0 0.0
    %263 = vmatpush1.msra.mxu0 %v186
    %264 = vmatprep.subr.mxu0 0.0
    %265 = vmatpush1.msra.mxu0 %v187
    %266 = vmatprep.subr.mxu0 0.0
    %267 = vmatpush1.msra.mxu0 %v188
    %268 = vmatprep.subr.mxu0 0.0
    %269 = vmatpush1.msra.mxu0 %v189
    %270 = vmatprep.subr.mxu0 0.0
    %271 = vmatpush1.msra.mxu0 %v190
    %272 = vmatprep.subr.mxu0 0.0
    %273 = vmatpush1.msra.mxu0 %v191
    %274 = vmatprep.subr.mxu0 0.0
    %275 = vmatpush1.msra.mxu0 %v192
    %276 = vmatprep.subr.mxu0 0.0
    %277 = vmatpush1.msra.mxu0 %v193
    %278 = vmatprep.subr.mxu0 0.0
    %279 = vmatpush1.msra.mxu0 %v194
    %280 = vmatprep.mubr.f32.mxu0 %v56
    %281 = vmatmul.mubr.f32.gmra.mrb[0].mxu0 %v138
    %v282 = vpop.f32.mrb[0].mxu0
    %v283 = vadd.f32 %v215, %v282
    %v284 = vpop.f32.mrb[0].mxu0
    %285 = vmatprep.mubr.f32.mxu0 %v57
    %286 = vmatmul.mubr.f32.gmra.mrb[0].mxu0 %v139
    %v287 = vpop.f32.mrb[0].mxu0
    %v288 = vadd.f32 %v215, %v287
    %v289 = vpop.f32.mrb[0].mxu0
    %290 = vmatprep.mubr.f32.mxu0 %v58
    %291 = vmatmul.mubr.f32.gmra.mrb[0].mxu0 %v140
    %v292 = vpop.f32.mrb[0].mxu0
    %v293 = vadd.f32 %v215, %v292
    %v294 = vpop.f32.mrb[0].mxu0
    %295 = vmatprep.mubr.f32.mxu0 %v59
    %296 = vmatmul.mubr.f32.gmra.mrb[0].mxu0 %v141
    %v297 = vpop.f32.mrb[0].mxu0
    %v298 = vadd.f32 %v215, %v297
    %v299 = vpop.f32.mrb[0].mxu0
    %300 = vdwg.mxu0
    %301 = vmatprep.subr.mxu0 0.0
    %302 = vmatpush1.msra.mxu0 %v195
    %303 = vmatprep.subr.mxu0 0.0
    %304 = vmatpush1.msra.mxu0 %v196
    %305 = vmatprep.subr.mxu0 0.0
    %306 = vmatpush1.msra.mxu0 %v197
    %307 = vmatprep.subr.mxu0 0.0
    %308 = vmatpush1.msra.mxu0 %v198
    %309 = vmatprep.subr.mxu0 0.0
    %310 = vmatpush1.msra.mxu0 %v199
    %311 = vmatprep.subr.mxu0 0.0
    %312 = vmatpush1.msra.mxu0 %v200
    %313 = vmatprep.subr.mxu0 0.0
    %314 = vmatpush1.msra.mxu0 %v201
    %315 = vmatprep.subr.mxu0 0.0
    %316 = vmatpush1.msra.mxu0 %v202
    %317 = vmatprep.subr.mxu0 0.0
    %318 = vmatpush1.msra.mxu0 %v203
    %319 = vmatprep.subr.mxu0 0.0
    %320 = vmatpush1.msra.mxu0 %v204
    %321 = vmatprep.subr.mxu0 0.0
    %322 = vmatpush1.msra.mxu0 %v205
    %323 = vmatprep.subr.mxu0 0.0
    %324 = vmatpush1.msra.mxu0 %v206
    %325 = vmatprep.subr.mxu0 0.0
    %326 = vmatpush1.msra.mxu0 %v207
    %327 = vmatprep.subr.mxu0 0.0
    %328 = vmatpush1.msra.mxu0 %v208
    %329 = vmatprep.subr.mxu0 0.0
    %330 = vmatpush1.msra.mxu0 %v209
    %331 = vmatprep.subr.mxu0 0.0
    %332 = vmatpush1.msra.mxu0 %v210
    %333 = vmatprep.subr.mxu0 0.0
    %334 = vmatpush1.msra.mxu0 0.0
    %335 = vmatprep.subr.mxu0 0.0
    %336 = vmatpush1.msra.mxu0 0.0
    %337 = vmatprep.subr.mxu0 0.0
    %338 = vmatpush1.msra.mxu0 0.0
    %339 = vmatprep.subr.mxu0 0.0
    %340 = vmatpush1.msra.mxu0 0.0
    %341 = vmatprep.subr.mxu0 0.0
    %342 = vmatpush1.msra.mxu0 0.0
    %343 = vmatprep.subr.mxu0 0.0
    %344 = vmatpush1.msra.mxu0 0.0
    %345 = vmatprep.subr.mxu0 0.0
    %346 = vmatpush1.msra.mxu0 0.0
    %347 = vmatprep.subr.mxu0 0.0
    %348 = vmatpush1.msra.mxu0 0.0
    %349 = vmatprep.subr.mxu0 0.0
    %350 = vmatpush1.msra.mxu0 0.0
    %351 = vmatprep.subr.mxu0 0.0
    %352 = vmatpush1.msra.mxu0 0.0
    %353 = vmatprep.subr.mxu0 0.0
    %354 = vmatpush1.msra.mxu0 0.0
    %355 = vmatprep.subr.mxu0 0.0
    %356 = vmatpush1.msra.mxu0 0.0
    %357 = vmatprep.subr.mxu0 0.0
    %358 = vmatpush1.msra.mxu0 0.0
    %359 = vmatprep.subr.mxu0 0.0
    %360 = vmatpush1.msra.mxu0 0.0
    %361 = vmatprep.subr.mxu0 0.0
    %362 = vmatpush1.msra.mxu0 0.0
    %363 = vmatprep.subr.mxu0 0.0
    %364 = vmatpush1.msra.mxu0 0.0
    %365 = vmatprep.mubr.f32.mxu0 0.0
    %366 = vmatmul.mubr.f32.gmra.mrb[0].mxu0 %v159
    %v367 = vpop.f32.mrb[0].mxu0
    %v368 = vadd.f32 %v283, %v367
    %v369 = vpop.f32.mrb[0].mxu0
    %370 = vmatprep.mubr.f32.mxu0 0.0
    %371 = vmatmul.mubr.f32.gmra.mrb[0].mxu0 %v160
    %v372 = vpop.f32.mrb[0].mxu0
    %v373 = vadd.f32 %v288, %v372
    %v374 = vpop.f32.mrb[0].mxu0
    %375 = vmatprep.mubr.f32.mxu0 0.0
    %376 = vmatmul.mubr.f32.gmra.mrb[0].mxu0 %v161
    %v377 = vpop.f32.mrb[0].mxu0
    %v378 = vadd.f32 %v293, %v377
    %v379 = vpop.f32.mrb[0].mxu0
    %380 = vmatprep.mubr.f32.mxu0 0.0
    %381 = vmatmul.mubr.f32.gmra.mrb[0].mxu0 %v162
    %v382 = vpop.f32.mrb[0].mxu0
    %v383 = vadd.f32 %v298, %v382
    %v384 = vpop.f32.mrb[0].mxu0
    %385 = vdwg.mxu0
    %v386 = vmax.f32 %v368, 0.0
    %v387 = vmax.f32 %v373, 0.0
    %v388 = vmax.f32 %v378, 0.0
    %v389 = vmax.f32 %v383, 0.0
    %v390 = vrot.slane %v386, 7
    %v391 = vrot.slane %v387, 7
    %v392 = vrot.slane %v388, 7
    %v393 = vrot.slane %v389, 7
    %v394 = vsel %vm125, %v392, %v393
    %v395 = vsel %vm125, %v391, %v392
    %v396 = vsel %vm125, %v390, %v391
    %v397 = vsel %vm125, %v393, %v390
    %v398 = vsel %vm134, %v397, 0.0
    %v399 = vsel %vm135, %v396, 0.0
    %v400 = vsel %vm136, %v395, 0.0
    %v401 = vsel %vm137, %v394, 0.0
    %v402 = vrot.slane %v386, 1
    %v403 = vrot.slane %v387, 1
    %v404 = vrot.slane %v388, 1
    %v405 = vrot.slane %v389, 1
    %v406 = vsel %vm146, %v404, %v405
    %v407 = vsel %vm146, %v403, %v404
    %v408 = vsel %vm146, %v402, %v403
    %v409 = vsel %vm146, %v405, %v402
    %v410 = vsel %vm155, %v408, 0.0
    %v411 = vsel %vm156, %v407, 0.0
    %v412 = vsel %vm157, %v406, 0.0
    %v413 = vsel %vm158, %v409, 0.0
    %v414 = vld [vmem:[#allocation5 + $0x180] sm:$0xff]
    %v415 = vld [vmem:[#allocation5 + $0x188] sm:$0xff]
    %v416 = vld [vmem:[#allocation5 + $0x190] sm:$0xff]
    %v417 = vld [vmem:[#allocation5 + $0x198] sm:$0xff]
    %v418 = vld [vmem:[#allocation5 + $0x1a0] sm:$0xff]
    %v419 = vld [vmem:[#allocation5 + $0x1a8] sm:$0xff]
    %v420 = vld [vmem:[#allocation5 + $0x1b0] sm:$0xff]
    %v421 = vld [vmem:[#allocation5 + $0x1b8] sm:$0xff]
    %v422 = vld [vmem:[#allocation5 + $0x1c0] sm:$0xff]
    %v423 = vld [vmem:[#allocation5 + $0x1c8] sm:$0xff]
    %v424 = vld [vmem:[#allocation5 + $0x1d0] sm:$0xff]
    %v425 = vld [vmem:[#allocation5 + $0x1d8] sm:$0xff]
    %v426 = vld [vmem:[#allocation5 + $0x1e0] sm:$0xff]
    %v427 = vld [vmem:[#allocation5 + $0x1e8] sm:$0xff]
    %v428 = vld [vmem:[#allocation5 + $0x1f0] sm:$0xff]
    %v429 = vld [vmem:[#allocation5 + $0x1f8] sm:$0xff]
    %v430 = vld [vmem:[#allocation5 + $0x200] sm:$0xff]
    %v431 = vld [vmem:[#allocation5 + $0x208] sm:$0xff]
    %v432 = vld [vmem:[#allocation5 + $0x210] sm:$0xff]
    %v433 = vld [vmem:[#allocation5 + $0x218] sm:$0xff]
    %v434 = vld [vmem:[#allocation5 + $0x220] sm:$0xff]
    %v435 = vld [vmem:[#allocation5 + $0x228] sm:$0xff]
    %v436 = vld [vmem:[#allocation5 + $0x230] sm:$0xff]
    %v437 = vld [vmem:[#allocation5 + $0x238] sm:$0xff]
    %v438 = vld [vmem:[#allocation5 + $0x240] sm:$0xff]
    %v439 = vld [vmem:[#allocation5 + $0x248] sm:$0xff]
    %v440 = vld [vmem:[#allocation5 + $0x250] sm:$0xff]
    %v441 = vld [vmem:[#allocation5 + $0x258] sm:$0xff]
    %v442 = vld [vmem:[#allocation5 + $0x260] sm:$0xff]
    %v443 = vld [vmem:[#allocation5 + $0x268] sm:$0xff]
    %v444 = vld [vmem:[#allocation5 + $0x270] sm:$0xff]
    %v445 = vld [vmem:[#allocation5 + $0x278] sm:$0xff]
    %v446 = vld [vmem:[#allocation5 + $0x280] sm:$0xff]
    %v447 = vld [vmem:[#allocation5 + $0x288] sm:$0xff]
    %v448 = vld [vmem:[#allocation5 + $0x290] sm:$0xff]
    %v449 = vld [vmem:[#allocation5 + $0x298] sm:$0xff]
    %v450 = vld [vmem:[#allocation5 + $0x2a0] sm:$0xff]
    %v451 = vld [vmem:[#allocation5 + $0x2a8] sm:$0xff]
    %v452 = vld [vmem:[#allocation5 + $0x2b0] sm:$0xff]
    %v453 = vld [vmem:[#allocation5 + $0x2b8] sm:$0xff]
    %v454 = vld [vmem:[#allocation5 + $0x2c0] sm:$0xff]
    %v455 = vld [vmem:[#allocation5 + $0x2c8] sm:$0xff]
    %v456 = vld [vmem:[#allocation5 + $0x2d0] sm:$0xff]
    %v457 = vld [vmem:[#allocation5 + $0x2d8] sm:$0xff]
    %v458 = vld [vmem:[#allocation5 + $0x2e0] sm:$0xff]
    %v459 = vld [vmem:[#allocation5 + $0x2e8] sm:$0xff]
    %v460 = vld [vmem:[#allocation5 + $0x2f0] sm:$0xff]
    %v461 = vld [vmem:[#allocation5 + $0x2f8] sm:$0xff]
    %v462 = vld [vmem:[#allocation7 + $0x8] sm:$0x1]
    %v463 = vlaneseq
    %v464 = vshrl.u32 %v463, 7
    %v465 = vsub.s32 0, %v464
    %v466 = vrot.slane %v462, %v465
    %467 = vmatprep.subr.mxu0 0.0
    %468 = vmatpush1.msra.mxu0 %v414
    %469 = vmatprep.subr.mxu0 0.0
    %470 = vmatpush1.msra.mxu0 %v415
    %471 = vmatprep.subr.mxu0 0.0
    %472 = vmatpush1.msra.mxu0 %v416
    %473 = vmatprep.subr.mxu0 0.0
    %474 = vmatpush1.msra.mxu0 %v417
    %475 = vmatprep.subr.mxu0 0.0
    %476 = vmatpush1.msra.mxu0 %v418
    %477 = vmatprep.subr.mxu0 0.0
    %478 = vmatpush1.msra.mxu0 %v419
    %479 = vmatprep.subr.mxu0 0.0
    %480 = vmatpush1.msra.mxu0 %v420
    %481 = vmatprep.subr.mxu0 0.0
    %482 = vmatpush1.msra.mxu0 %v421
    %483 = vmatprep.subr.mxu0 0.0
    %484 = vmatpush1.msra.mxu0 %v422
    %485 = vmatprep.subr.mxu0 0.0
    %486 = vmatpush1.msra.mxu0 %v423
    %487 = vmatprep.subr.mxu0 0.0
    %488 = vmatpush1.msra.mxu0 %v424
    %489 = vmatprep.subr.mxu0 0.0
    %490 = vmatpush1.msra.mxu0 %v425
    %491 = vmatprep.subr.mxu0 0.0
    %492 = vmatpush1.msra.mxu0 %v426
    %493 = vmatprep.subr.mxu0 0.0
    %494 = vmatpush1.msra.mxu0 %v427
    %495 = vmatprep.subr.mxu0 0.0
    %496 = vmatpush1.msra.mxu0 %v428
    %497 = vmatprep.subr.mxu0 0.0
    %498 = vmatpush1.msra.mxu0 %v429
    %499 = vmatprep.subr.mxu0 0.0
    %500 = vmatpush1.msra.mxu0 %v430
    %501 = vmatprep.subr.mxu0 0.0
    %502 = vmatpush1.msra.mxu0 %v431
    %503 = vmatprep.subr.mxu0 0.0
    %504 = vmatpush1.msra.mxu0 %v432
    %505 = vmatprep.subr.mxu0 0.0
    %506 = vmatpush1.msra.mxu0 %v433
    %507 = vmatprep.subr.mxu0 0.0
    %508 = vmatpush1.msra.mxu0 %v434
    %509 = vmatprep.subr.mxu0 0.0
    %510 = vmatpush1.msra.mxu0 %v435
    %511 = vmatprep.subr.mxu0 0.0
    %512 = vmatpush1.msra.mxu0 %v436
    %513 = vmatprep.subr.mxu0 0.0
    %514 = vmatpush1.msra.mxu0 %v437
    %515 = vmatprep.subr.mxu0 0.0
    %516 = vmatpush1.msra.mxu0 %v438
    %517 = vmatprep.subr.mxu0 0.0
    %518 = vmatpush1.msra.mxu0 %v439
    %519 = vmatprep.subr.mxu0 0.0
    %520 = vmatpush1.msra.mxu0 %v440
    %521 = vmatprep.subr.mxu0 0.0
    %522 = vmatpush1.msra.mxu0 %v441
    %523 = vmatprep.subr.mxu0 0.0
    %524 = vmatpush1.msra.mxu0 %v442
    %525 = vmatprep.subr.mxu0 0.0
    %526 = vmatpush1.msra.mxu0 %v443
    %527 = vmatprep.subr.mxu0 0.0
    %528 = vmatpush1.msra.mxu0 %v444
    %529 = vmatprep.subr.mxu0 0.0
    %530 = vmatpush1.msra.mxu0 %v445
    %531 = vmatprep.mubr.f32.mxu0 %v386
    %532 = vmatmul.mubr.f32.gmra.mrb[0].mxu0 %v398
    %v533 = vpop.f32.mrb[0].mxu0
    %v534 = vadd.f32 %v466, %v533
    %v535 = vpop.f32.mrb[0].mxu0
    %536 = vmatprep.mubr.f32.mxu0 %v387
    %537 = vmatmul.mubr.f32.gmra.mrb[0].mxu0 %v399
    %v538 = vpop.f32.mrb[0].mxu0
    %v539 = vadd.f32 %v466, %v538
    %v540 = vpop.f32.mrb[0].mxu0
    %541 = vmatprep.mubr.f32.mxu0 %v388
    %542 = vmatmul.mubr.f32.gmra.mrb[0].mxu0 %v400
    %v543 = vpop.f32.mrb[0].mxu0
    %v544 = vadd.f32 %v466, %v543
    %v545 = vpop.f32.mrb[0].mxu0
    %546 = vmatprep.mubr.f32.mxu0 %v389
    %547 = vmatmul.mubr.f32.gmra.mrb[0].mxu0 %v401
    %v548 = vpop.f32.mrb[0].mxu0
    %v549 = vadd.f32 %v466, %v548
    %v550 = vpop.f32.mrb[0].mxu0
    %551 = vdwg.mxu0
    %552 = vmatprep.subr.mxu0 0.0
    %553 = vmatpush1.msra.mxu0 %v446
    %554 = vmatprep.subr.mxu0 0.0
    %555 = vmatpush1.msra.mxu0 %v447
    %556 = vmatprep.subr.mxu0 0.0
    %557 = vmatpush1.msra.mxu0 %v448
    %558 = vmatprep.subr.mxu0 0.0
    %559 = vmatpush1.msra.mxu0 %v449
    %560 = vmatprep.subr.mxu0 0.0
    %561 = vmatpush1.msra.mxu0 %v450
    %562 = vmatprep.subr.mxu0 0.0
    %563 = vmatpush1.msra.mxu0 %v451
    %564 = vmatprep.subr.mxu0 0.0
    %565 = vmatpush1.msra.mxu0 %v452
    %566 = vmatprep.subr.mxu0 0.0
    %567 = vmatpush1.msra.mxu0 %v453
    %568 = vmatprep.subr.mxu0 0.0
    %569 = vmatpush1.msra.mxu0 %v454
    %570 = vmatprep.subr.mxu0 0.0
    %571 = vmatpush1.msra.mxu0 %v455
    %572 = vmatprep.subr.mxu0 0.0
    %573 = vmatpush1.msra.mxu0 %v456
    %574 = vmatprep.subr.mxu0 0.0
    %575 = vmatpush1.msra.mxu0 %v457
    %576 = vmatprep.subr.mxu0 0.0
    %577 = vmatpush1.msra.mxu0 %v458
    %578 = vmatprep.subr.mxu0 0.0
    %579 = vmatpush1.msra.mxu0 %v459
    %580 = vmatprep.subr.mxu0 0.0
    %581 = vmatpush1.msra.mxu0 %v460
    %582 = vmatprep.subr.mxu0 0.0
    %583 = vmatpush1.msra.mxu0 %v461
    %584 = vmatprep.subr.mxu0 0.0
    %585 = vmatpush1.msra.mxu0 0.0
    %586 = vmatprep.subr.mxu0 0.0
    %587 = vmatpush1.msra.mxu0 0.0
    %588 = vmatprep.subr.mxu0 0.0
    %589 = vmatpush1.msra.mxu0 0.0
    %590 = vmatprep.subr.mxu0 0.0
    %591 = vmatpush1.msra.mxu0 0.0
    %592 = vmatprep.subr.mxu0 0.0
    %593 = vmatpush1.msra.mxu0 0.0
    %594 = vmatprep.subr.mxu0 0.0
    %595 = vmatpush1.msra.mxu0 0.0
    %596 = vmatprep.subr.mxu0 0.0
    %597 = vmatpush1.msra.mxu0 0.0
    %598 = vmatprep.subr.mxu0 0.0
    %599 = vmatpush1.msra.mxu0 0.0
    %600 = vmatprep.subr.mxu0 0.0
    %601 = vmatpush1.msra.mxu0 0.0
    %602 = vmatprep.subr.mxu0 0.0
    %603 = vmatpush1.msra.mxu0 0.0
    %604 = vmatprep.subr.mxu0 0.0
    %605 = vmatpush1.msra.mxu0 0.0
    %606 = vmatprep.subr.mxu0 0.0
    %607 = vmatpush1.msra.mxu0 0.0
    %608 = vmatprep.subr.mxu0 0.0
    %609 = vmatpush1.msra.mxu0 0.0
    %610 = vmatprep.subr.mxu0 0.0
    %611 = vmatpush1.msra.mxu0 0.0
    %612 = vmatprep.subr.mxu0 0.0
    %613 = vmatpush1.msra.mxu0 0.0
    %614 = vmatprep.subr.mxu0 0.0
    %615 = vmatpush1.msra.mxu0 0.0
    %616 = vmatprep.mubr.f32.mxu0 0.0
    %617 = vmatmul.mubr.f32.gmra.mrb[0].mxu0 %v410
    %v618 = vpop.f32.mrb[0].mxu0
    %v619 = vadd.f32 %v534, %v618
    %v620 = vpop.f32.mrb[0].mxu0
    %621 = vmatprep.mubr.f32.mxu0 0.0
    %622 = vmatmul.mubr.f32.gmra.mrb[0].mxu0 %v411
    %v623 = vpop.f32.mrb[0].mxu0
    %v624 = vadd.f32 %v539, %v623
    %v625 = vpop.f32.mrb[0].mxu0
    %626 = vmatprep.mubr.f32.mxu0 0.0
    %627 = vmatmul.mubr.f32.gmra.mrb[0].mxu0 %v412
    %v628 = vpop.f32.mrb[0].mxu0
    %v629 = vadd.f32 %v544, %v628
    %v630 = vpop.f32.mrb[0].mxu0
    %631 = vmatprep.mubr.f32.mxu0 0.0
    %632 = vmatmul.mubr.f32.gmra.mrb[0].mxu0 %v413
    %v633 = vpop.f32.mrb[0].mxu0
    %v634 = vadd.f32 %v549, %v633
    %v635 = vpop.f32.mrb[0].mxu0
    %636 = vdwg.mxu0
    %v637 = vmax.f32 %v619, 0.0
    %v638 = vmax.f32 %v624, 0.0
    %v639 = vmax.f32 %v629, 0.0
    %v640 = vmax.f32 %v634, 0.0
    %v641 = vld [vmem:[#allocation5 + $0x300] sm:$0xff]
    %v642 = vld [vmem:[#allocation5 + $0x308] sm:$0xff]
    %v643 = vld [vmem:[#allocation5 + $0x310] sm:$0xff]
    %v644 = vld [vmem:[#allocation5 + $0x318] sm:$0xff]
    %v645 = vld [vmem:[#allocation5 + $0x320] sm:$0xff]
    %v646 = vld [vmem:[#allocation5 + $0x328] sm:$0xff]
    %v647 = vld [vmem:[#allocation5 + $0x330] sm:$0xff]
    %v648 = vld [vmem:[#allocation5 + $0x338] sm:$0xff]
    %v649 = vld [vmem:[#allocation5 + $0x340] sm:$0xff]
    %v650 = vld [vmem:[#allocation5 + $0x348] sm:$0xff]
    %v651 = vld [vmem:[#allocation5 + $0x350] sm:$0xff]
    %v652 = vld [vmem:[#allocation5 + $0x358] sm:$0xff]
    %v653 = vld [vmem:[#allocation5 + $0x360] sm:$0xff]
    %v654 = vld [vmem:[#allocation5 + $0x368] sm:$0xff]
    %v655 = vld [vmem:[#allocation5 + $0x370] sm:$0xff]
    %v656 = vld [vmem:[#allocation5 + $0x378] sm:$0xff]
    %v657 = vld [vmem:[#allocation7 + $0x10] sm:$0x1]
    %v658 = vlaneseq
    %v659 = vshrl.u32 %v658, 7
    %v660 = vsub.s32 0, %v659
    %v661 = vrot.slane %v657, %v660
    %662 = vmatprep.subr.mxu0 0.0
    %663 = vmatpush1.msra.mxu0 %v641
    %664 = vmatprep.subr.mxu0 0.0
    %665 = vmatpush1.msra.mxu0 %v642
    %666 = vmatprep.subr.mxu0 0.0
    %667 = vmatpush1.msra.mxu0 %v643
    %668 = vmatprep.subr.mxu0 0.0
    %669 = vmatpush1.msra.mxu0 %v644
    %670 = vmatprep.subr.mxu0 0.0
    %671 = vmatpush1.msra.mxu0 %v645
    %672 = vmatprep.subr.mxu0 0.0
    %673 = vmatpush1.msra.mxu0 %v646
    %674 = vmatprep.subr.mxu0 0.0
    %675 = vmatpush1.msra.mxu0 %v647
    %676 = vmatprep.subr.mxu0 0.0
    %677 = vmatpush1.msra.mxu0 %v648
    %678 = vmatprep.subr.mxu0 0.0
    %679 = vmatpush1.msra.mxu0 %v649
    %680 = vmatprep.subr.mxu0 0.0
    %681 = vmatpush1.msra.mxu0 %v650
    %682 = vmatprep.subr.mxu0 0.0
    %683 = vmatpush1.msra.mxu0 %v651
    %684 = vmatprep.subr.mxu0 0.0
    %685 = vmatpush1.msra.mxu0 %v652
    %686 = vmatprep.subr.mxu0 0.0
    %687 = vmatpush1.msra.mxu0 %v653
    %688 = vmatprep.subr.mxu0 0.0
    %689 = vmatpush1.msra.mxu0 %v654
    %690 = vmatprep.subr.mxu0 0.0
    %691 = vmatpush1.msra.mxu0 %v655
    %692 = vmatprep.subr.mxu0 0.0
    %693 = vmatpush1.msra.mxu0 %v656
    %694 = vmatprep.subr.mxu0 0.0
    %695 = vmatpush1.msra.mxu0 0.0
    %696 = vmatprep.subr.mxu0 0.0
    %697 = vmatpush1.msra.mxu0 0.0
    %698 = vmatprep.subr.mxu0 0.0
    %699 = vmatpush1.msra.mxu0 0.0
    %700 = vmatprep.subr.mxu0 0.0
    %701 = vmatpush1.msra.mxu0 0.0
    %702 = vmatprep.subr.mxu0 0.0
    %703 = vmatpush1.msra.mxu0 0.0
    %704 = vmatprep.subr.mxu0 0.0
    %705 = vmatpush1.msra.mxu0 0.0
    %706 = vmatprep.subr.mxu0 0.0
    %707 = vmatpush1.msra.mxu0 0.0
    %708 = vmatprep.subr.mxu0 0.0
    %709 = vmatpush1.msra.mxu0 0.0
    %710 = vmatprep.subr.mxu0 0.0
    %711 = vmatpush1.msra.mxu0 0.0
    %712 = vmatprep.subr.mxu0 0.0
    %713 = vmatpush1.msra.mxu0 0.0
    %714 = vmatprep.subr.mxu0 0.0
    %715 = vmatpush1.msra.mxu0 0.0
    %716 = vmatprep.subr.mxu0 0.0
    %717 = vmatpush1.msra.mxu0 0.0
    %718 = vmatprep.subr.mxu0 0.0
    %719 = vmatpush1.msra.mxu0 0.0
    %720 = vmatprep.subr.mxu0 0.0
    %721 = vmatpush1.msra.mxu0 0.0
    %722 = vmatprep.subr.mxu0 0.0
    %723 = vmatpush1.msra.mxu0 0.0
    %724 = vmatprep.subr.mxu0 0.0
    %725 = vmatpush1.msra.mxu0 0.0
    %726 = vmatprep.mubr.f32.mxu0 0.0
    %727 = vmatmul.mubr.f32.gmra.mrb[0].mxu0 %v637
    %v728 = vpop.f32.mrb[0].mxu0
    %v729 = vadd.f32 %v661, %v728
    %v730 = vpop.f32.mrb[0].mxu0
    %731 = vmatprep.mubr.f32.mxu0 0.0
    %732 = vmatmul.mubr.f32.gmra.mrb[0].mxu0 %v638
    %v733 = vpop.f32.mrb[0].mxu0
    %v734 = vadd.f32 %v661, %v733
    %v735 = vpop.f32.mrb[0].mxu0
    %736 = vmatprep.mubr.f32.mxu0 0.0
    %737 = vmatmul.mubr.f32.gmra.mrb[0].mxu0 %v639
    %v738 = vpop.f32.mrb[0].mxu0
    %v739 = vadd.f32 %v661, %v738
    %v740 = vpop.f32.mrb[0].mxu0
    %741 = vmatprep.mubr.f32.mxu0 0.0
    %742 = vmatmul.mubr.f32.gmra.mrb[0].mxu0 %v640
    %v743 = vpop.f32.mrb[0].mxu0
    %v744 = vadd.f32 %v661, %v743
    %v745 = vpop.f32.mrb[0].mxu0
    %746 = vdwg.mxu0
    %v747 = vld [vmem:[#allocation5 + $0x380] sm:$0xff]
    %v748 = vld [vmem:[#allocation5 + $0x388] sm:$0xff]
    %v749 = vld [vmem:[#allocation5 + $0x390] sm:$0xff]
    %v750 = vld [vmem:[#allocation5 + $0x398] sm:$0xff]
    %v751 = vld [vmem:[#allocation5 + $0x3a0] sm:$0xff]
    %v752 = vld [vmem:[#allocation5 + $0x3a8] sm:$0xff]
    %v753 = vld [vmem:[#allocation5 + $0x3b0] sm:$0xff]
    %v754 = vld [vmem:[#allocation5 + $0x3b8] sm:$0xff]
    %v755 = vld [vmem:[#allocation5 + $0x3c0] sm:$0xff]
    %v756 = vld [vmem:[#allocation5 + $0x3c8] sm:$0xff]
    %v757 = vld [vmem:[#allocation5 + $0x3d0] sm:$0xff]
    %v758 = vld [vmem:[#allocation5 + $0x3d8] sm:$0xff]
    %v759 = vld [vmem:[#allocation5 + $0x3e0] sm:$0xff]
    %v760 = vld [vmem:[#allocation5 + $0x3e8] sm:$0xff]
    %v761 = vld [vmem:[#allocation5 + $0x3f0] sm:$0xff]
    %v762 = vld [vmem:[#allocation5 + $0x3f8] sm:$0xff]
    %v763 = vld [vmem:[#allocation7 + $0x18] sm:$0x1]
    %v764 = vlaneseq
    %v765 = vshrl.u32 %v764, 7
    %v766 = vsub.s32 0, %v765
    %v767 = vrot.slane %v763, %v766
    %768 = vmatprep.subr.mxu0 0.0
    %769 = vmatpush1.msra.mxu0 %v747
    %770 = vmatprep.subr.mxu0 0.0
    %771 = vmatpush1.msra.mxu0 %v748
    %772 = vmatprep.subr.mxu0 0.0
    %773 = vmatpush1.msra.mxu0 %v749
    %774 = vmatprep.subr.mxu0 0.0
    %775 = vmatpush1.msra.mxu0 %v750
    %776 = vmatprep.subr.mxu0 0.0
    %777 = vmatpush1.msra.mxu0 %v751
    %778 = vmatprep.subr.mxu0 0.0
    %779 = vmatpush1.msra.mxu0 %v752
    %780 = vmatprep.subr.mxu0 0.0
    %781 = vmatpush1.msra.mxu0 %v753
    %782 = vmatprep.subr.mxu0 0.0
    %783 = vmatpush1.msra.mxu0 %v754
    %784 = vmatprep.subr.mxu0 0.0
    %785 = vmatpush1.msra.mxu0 %v755
    %786 = vmatprep.subr.mxu0 0.0
    %787 = vmatpush1.msra.mxu0 %v756
    %788 = vmatprep.subr.mxu0 0.0
    %789 = vmatpush1.msra.mxu0 %v757
    %790 = vmatprep.subr.mxu0 0.0
    %791 = vmatpush1.msra.mxu0 %v758
    %792 = vmatprep.subr.mxu0 0.0
    %793 = vmatpush1.msra.mxu0 %v759
    %794 = vmatprep.subr.mxu0 0.0
    %795 = vmatpush1.msra.mxu0 %v760
    %796 = vmatprep.subr.mxu0 0.0
    %797 = vmatpush1.msra.mxu0 %v761
    %798 = vmatprep.subr.mxu0 0.0
    %799 = vmatpush1.msra.mxu0 %v762
    %800 = vmatprep.subr.mxu0 0.0
    %801 = vmatpush1.msra.mxu0 0.0
    %802 = vmatprep.subr.mxu0 0.0
    %803 = vmatpush1.msra.mxu0 0.0
    %804 = vmatprep.subr.mxu0 0.0
    %805 = vmatpush1.msra.mxu0 0.0
    %806 = vmatprep.subr.mxu0 0.0
    %807 = vmatpush1.msra.mxu0 0.0
    %808 = vmatprep.subr.mxu0 0.0
    %809 = vmatpush1.msra.mxu0 0.0
    %810 = vmatprep.subr.mxu0 0.0
    %811 = vmatpush1.msra.mxu0 0.0
    %812 = vmatprep.subr.mxu0 0.0
    %813 = vmatpush1.msra.mxu0 0.0
    %814 = vmatprep.subr.mxu0 0.0
    %815 = vmatpush1.msra.mxu0 0.0
    %816 = vmatprep.subr.mxu0 0.0
    %817 = vmatpush1.msra.mxu0 0.0
    %818 = vmatprep.subr.mxu0 0.0
    %819 = vmatpush1.msra.mxu0 0.0
    %820 = vmatprep.subr.mxu0 0.0
    %821 = vmatpush1.msra.mxu0 0.0
    %822 = vmatprep.subr.mxu0 0.0
    %823 = vmatpush1.msra.mxu0 0.0
    %824 = vmatprep.subr.mxu0 0.0
    %825 = vmatpush1.msra.mxu0 0.0
    %826 = vmatprep.subr.mxu0 0.0
    %827 = vmatpush1.msra.mxu0 0.0
    %828 = vmatprep.subr.mxu0 0.0
    %829 = vmatpush1.msra.mxu0 0.0
    %830 = vmatprep.subr.mxu0 0.0
    %831 = vmatpush1.msra.mxu0 0.0
    %832 = vmatprep.mubr.f32.mxu0 0.0
    %833 = vmatmul.mubr.f32.gmra.mrb[0].mxu0 %v729
    %v834 = vpop.f32.mrb[0].mxu0
    %v835 = vadd.f32 %v767, %v834
    %v836 = vpop.f32.mrb[0].mxu0
    %837 = vmatprep.mubr.f32.mxu0 0.0
    %838 = vmatmul.mubr.f32.gmra.mrb[0].mxu0 %v734
    %v839 = vpop.f32.mrb[0].mxu0
    %v840 = vadd.f32 %v767, %v839
    %v841 = vpop.f32.mrb[0].mxu0
    %842 = vmatprep.mubr.f32.mxu0 0.0
    %843 = vmatmul.mubr.f32.gmra.mrb[0].mxu0 %v739
    %v844 = vpop.f32.mrb[0].mxu0
    %v845 = vadd.f32 %v767, %v844
    %v846 = vpop.f32.mrb[0].mxu0
    %847 = vmatprep.mubr.f32.mxu0 0.0
    %848 = vmatmul.mubr.f32.gmra.mrb[0].mxu0 %v744
    %v849 = vpop.f32.mrb[0].mxu0
    %v850 = vadd.f32 %v767, %v849
    %v851 = vpop.f32.mrb[0].mxu0
    %852 = vdwg.mxu0
    %v853 = vmax.f32 %v835, 0.0
    %v854 = vmax.f32 %v840, 0.0
    %v855 = vmax.f32 %v845, 0.0
    %v856 = vmax.f32 %v850, 0.0
    %v857 = vrot.slane %v853, 7
    %v858 = vrot.slane %v854, 7
    %v859 = vrot.slane %v855, 7
    %v860 = vrot.slane %v856, 7
    %v861 = vsel %vm125, %v859, %v860
    %v862 = vsel %vm125, %v858, %v859
    %v863 = vsel %vm125, %v857, %v858
    %v864 = vsel %vm125, %v860, %v857
    %v865 = vsel %vm134, %v864, 0.0
    %v866 = vsel %vm135, %v863, 0.0
    %v867 = vsel %vm136, %v862, 0.0
    %v868 = vsel %vm137, %v861, 0.0
    %v869 = vrot.slane %v853, 1
    %v870 = vrot.slane %v854, 1
    %v871 = vrot.slane %v855, 1
    %v872 = vrot.slane %v856, 1
    %v873 = vsel %vm146, %v871, %v872
    %v874 = vsel %vm146, %v870, %v871
    %v875 = vsel %vm146, %v869, %v870
    %v876 = vsel %vm146, %v872, %v869
    %v877 = vsel %vm155, %v875, 0.0
    %v878 = vsel %vm156, %v874, 0.0
    %v879 = vsel %vm157, %v873, 0.0
    %v880 = vsel %vm158, %v876, 0.0
    %v881 = vld [vmem:[#allocation5 + $0x400] sm:$0xff]
    %v882 = vld [vmem:[#allocation5 + $0x408] sm:$0xff]
    %v883 = vld [vmem:[#allocation5 + $0x410] sm:$0xff]
    %v884 = vld [vmem:[#allocation5 + $0x418] sm:$0xff]
    %v885 = vld [vmem:[#allocation5 + $0x420] sm:$0xff]
    %v886 = vld [vmem:[#allocation5 + $0x428] sm:$0xff]
    %v887 = vld [vmem:[#allocation5 + $0x430] sm:$0xff]
    %v888 = vld [vmem:[#allocation5 + $0x438] sm:$0xff]
    %v889 = vld [vmem:[#allocation5 + $0x440] sm:$0xff]
    %v890 = vld [vmem:[#allocation5 + $0x448] sm:$0xff]
    %v891 = vld [vmem:[#allocation5 + $0x450] sm:$0xff]
    %v892 = vld [vmem:[#allocation5 + $0x458] sm:$0xff]
    %v893 = vld [vmem:[#allocation5 + $0x460] sm:$0xff]
    %v894 = vld [vmem:[#allocation5 + $0x468] sm:$0xff]
    %v895 = vld [vmem:[#allocation5 + $0x470] sm:$0xff]
    %v896 = vld [vmem:[#allocation5 + $0x478] sm:$0xff]
    %v897 = vld [vmem:[#allocation5 + $0x480] sm:$0xff]
    %v898 = vld [vmem:[#allocation5 + $0x488] sm:$0xff]
    %v899 = vld [vmem:[#allocation5 + $0x490] sm:$0xff]
    %v900 = vld [vmem:[#allocation5 + $0x498] sm:$0xff]
    %v901 = vld [vmem:[#allocation5 + $0x4a0] sm:$0xff]
    %v902 = vld [vmem:[#allocation5 + $0x4a8] sm:$0xff]
    %v903 = vld [vmem:[#allocation5 + $0x4b0] sm:$0xff]
    %v904 = vld [vmem:[#allocation5 + $0x4b8] sm:$0xff]
    %v905 = vld [vmem:[#allocation5 + $0x4c0] sm:$0xff]
    %v906 = vld [vmem:[#allocation5 + $0x4c8] sm:$0xff]
    %v907 = vld [vmem:[#allocation5 + $0x4d0] sm:$0xff]
    %v908 = vld [vmem:[#allocation5 + $0x4d8] sm:$0xff]
    %v909 = vld [vmem:[#allocation5 + $0x4e0] sm:$0xff]
    %v910 = vld [vmem:[#allocation5 + $0x4e8] sm:$0xff]
    %v911 = vld [vmem:[#allocation5 + $0x4f0] sm:$0xff]
    %v912 = vld [vmem:[#allocation5 + $0x4f8] sm:$0xff]
    %v913 = vld [vmem:[#allocation5 + $0x500] sm:$0xff]
    %v914 = vld [vmem:[#allocation5 + $0x508] sm:$0xff]
    %v915 = vld [vmem:[#allocation5 + $0x510] sm:$0xff]
    %v916 = vld [vmem:[#allocation5 + $0x518] sm:$0xff]
    %v917 = vld [vmem:[#allocation5 + $0x520] sm:$0xff]
    %v918 = vld [vmem:[#allocation5 + $0x528] sm:$0xff]
    %v919 = vld [vmem:[#allocation5 + $0x530] sm:$0xff]
    %v920 = vld [vmem:[#allocation5 + $0x538] sm:$0xff]
    %v921 = vld [vmem:[#allocation5 + $0x540] sm:$0xff]
    %v922 = vld [vmem:[#allocation5 + $0x548] sm:$0xff]
    %v923 = vld [vmem:[#allocation5 + $0x550] sm:$0xff]
    %v924 = vld [vmem:[#allocation5 + $0x558] sm:$0xff]
    %v925 = vld [vmem:[#allocation5 + $0x560] sm:$0xff]
    %v926 = vld [vmem:[#allocation5 + $0x568] sm:$0xff]
    %v927 = vld [vmem:[#allocation5 + $0x570] sm:$0xff]
    %v928 = vld [vmem:[#allocation5 + $0x578] sm:$0xff]
    %v929 = vld [vmem:[#allocation7 + $0x20] sm:$0x1]
    %v930 = vlaneseq
    %v931 = vshrl.u32 %v930, 7
    %v932 = vsub.s32 0, %v931
    %v933 = vrot.slane %v929, %v932
    %934 = vmatprep.subr.mxu0 0.0
    %935 = vmatpush1.msra.mxu0 %v881
    %936 = vmatprep.subr.mxu0 0.0
    %937 = vmatpush1.msra.mxu0 %v882
    %938 = vmatprep.subr.mxu0 0.0
    %939 = vmatpush1.msra.mxu0 %v883
    %940 = vmatprep.subr.mxu0 0.0
    %941 = vmatpush1.msra.mxu0 %v884
    %942 = vmatprep.subr.mxu0 0.0
    %943 = vmatpush1.msra.mxu0 %v885
    %944 = vmatprep.subr.mxu0 0.0
    %945 = vmatpush1.msra.mxu0 %v886
    %946 = vmatprep.subr.mxu0 0.0
    %947 = vmatpush1.msra.mxu0 %v887
    %948 = vmatprep.subr.mxu0 0.0
    %949 = vmatpush1.msra.mxu0 %v888
    %950 = vmatprep.subr.mxu0 0.0
    %951 = vmatpush1.msra.mxu0 %v889
    %952 = vmatprep.subr.mxu0 0.0
    %953 = vmatpush1.msra.mxu0 %v890
    %954 = vmatprep.subr.mxu0 0.0
    %955 = vmatpush1.msra.mxu0 %v891
    %956 = vmatprep.subr.mxu0 0.0
    %957 = vmatpush1.msra.mxu0 %v892
    %958 = vmatprep.subr.mxu0 0.0
    %959 = vmatpush1.msra.mxu0 %v893
    %960 = vmatprep.subr.mxu0 0.0
    %961 = vmatpush1.msra.mxu0 %v894
    %962 = vmatprep.subr.mxu0 0.0
    %963 = vmatpush1.msra.mxu0 %v895
    %964 = vmatprep.subr.mxu0 0.0
    %965 = vmatpush1.msra.mxu0 %v896
    %966 = vmatprep.subr.mxu0 0.0
    %967 = vmatpush1.msra.mxu0 %v897
    %968 = vmatprep.subr.mxu0 0.0
    %969 = vmatpush1.msra.mxu0 %v898
    %970 = vmatprep.subr.mxu0 0.0
    %971 = vmatpush1.msra.mxu0 %v899
    %972 = vmatprep.subr.mxu0 0.0
    %973 = vmatpush1.msra.mxu0 %v900
    %974 = vmatprep.subr.mxu0 0.0
    %975 = vmatpush1.msra.mxu0 %v901
    %976 = vmatprep.subr.mxu0 0.0
    %977 = vmatpush1.msra.mxu0 %v902
    %978 = vmatprep.subr.mxu0 0.0
    %979 = vmatpush1.msra.mxu0 %v903
    %980 = vmatprep.subr.mxu0 0.0
    %981 = vmatpush1.msra.mxu0 %v904
    %982 = vmatprep.subr.mxu0 0.0
    %983 = vmatpush1.msra.mxu0 %v905
    %984 = vmatprep.subr.mxu0 0.0
    %985 = vmatpush1.msra.mxu0 %v906
    %986 = vmatprep.subr.mxu0 0.0
    %987 = vmatpush1.msra.mxu0 %v907
    %988 = vmatprep.subr.mxu0 0.0
    %989 = vmatpush1.msra.mxu0 %v908
    %990 = vmatprep.subr.mxu0 0.0
    %991 = vmatpush1.msra.mxu0 %v909
    %992 = vmatprep.subr.mxu0 0.0
    %993 = vmatpush1.msra.mxu0 %v910
    %994 = vmatprep.subr.mxu0 0.0
    %995 = vmatpush1.msra.mxu0 %v911
    %996 = vmatprep.subr.mxu0 0.0
    %997 = vmatpush1.msra.mxu0 %v912
    %998 = vmatprep.mubr.f32.mxu0 %v853
    %999 = vmatmul.mubr.f32.gmra.mrb[0].mxu0 %v865
    %v1000 = vpop.f32.mrb[0].mxu0
    %v1001 = vadd.f32 %v933, %v1000
    %v1002 = vpop.f32.mrb[0].mxu0
    %1003 = vmatprep.mubr.f32.mxu0 %v854
    %1004 = vmatmul.mubr.f32.gmra.mrb[0].mxu0 %v866
    %v1005 = vpop.f32.mrb[0].mxu0
    %v1006 = vadd.f32 %v933, %v1005
    %v1007 = vpop.f32.mrb[0].mxu0
    %1008 = vmatprep.mubr.f32.mxu0 %v855
    %1009 = vmatmul.mubr.f32.gmra.mrb[0].mxu0 %v867
    %v1010 = vpop.f32.mrb[0].mxu0
    %v1011 = vadd.f32 %v933, %v1010
    %v1012 = vpop.f32.mrb[0].mxu0
    %1013 = vmatprep.mubr.f32.mxu0 %v856
    %1014 = vmatmul.mubr.f32.gmra.mrb[0].mxu0 %v868
    %v1015 = vpop.f32.mrb[0].mxu0
    %v1016 = vadd.f32 %v933, %v1015
    %v1017 = vpop.f32.mrb[0].mxu0
    %1018 = vdwg.mxu0
    %1019 = vmatprep.subr.mxu0 0.0
    %1020 = vmatpush1.msra.mxu0 %v913
    %1021 = vmatprep.subr.mxu0 0.0
    %1022 = vmatpush1.msra.mxu0 %v914
    %1023 = vmatprep.subr.mxu0 0.0
    %1024 = vmatpush1.msra.mxu0 %v915
    %1025 = vmatprep.subr.mxu0 0.0
    %1026 = vmatpush1.msra.mxu0 %v916
    %1027 = vmatprep.subr.mxu0 0.0
    %1028 = vmatpush1.msra.mxu0 %v917
    %1029 = vmatprep.subr.mxu0 0.0
    %1030 = vmatpush1.msra.mxu0 %v918
    %1031 = vmatprep.subr.mxu0 0.0
    %1032 = vmatpush1.msra.mxu0 %v919
    %1033 = vmatprep.subr.mxu0 0.0
    %1034 = vmatpush1.msra.mxu0 %v920
    %1035 = vmatprep.subr.mxu0 0.0
    %1036 = vmatpush1.msra.mxu0 %v921
    %1037 = vmatprep.subr.mxu0 0.0
    %1038 = vmatpush1.msra.mxu0 %v922
    %1039 = vmatprep.subr.mxu0 0.0
    %1040 = vmatpush1.msra.mxu0 %v923
    %1041 = vmatprep.subr.mxu0 0.0
    %1042 = vmatpush1.msra.mxu0 %v924
    %1043 = vmatprep.subr.mxu0 0.0
    %1044 = vmatpush1.msra.mxu0 %v925
    %1045 = vmatprep.subr.mxu0 0.0
    %1046 = vmatpush1.msra.mxu0 %v926
    %1047 = vmatprep.subr.mxu0 0.0
    %1048 = vmatpush1.msra.mxu0 %v927
    %1049 = vmatprep.subr.mxu0 0.0
    %1050 = vmatpush1.msra.mxu0 %v928
    %1051 = vmatprep.subr.mxu0 0.0
    %1052 = vmatpush1.msra.mxu0 0.0
    %1053 = vmatprep.subr.mxu0 0.0
    %1054 = vmatpush1.msra.mxu0 0.0
    %1055 = vmatprep.subr.mxu0 0.0
    %1056 = vmatpush1.msra.mxu0 0.0
    %1057 = vmatprep.subr.mxu0 0.0
    %1058 = vmatpush1.msra.mxu0 0.0
    %1059 = vmatprep.subr.mxu0 0.0
    %1060 = vmatpush1.msra.mxu0 0.0
    %1061 = vmatprep.subr.mxu0 0.0
    %1062 = vmatpush1.msra.mxu0 0.0
    %1063 = vmatprep.subr.mxu0 0.0
    %1064 = vmatpush1.msra.mxu0 0.0
    %1065 = vmatprep.subr.mxu0 0.0
    %1066 = vmatpush1.msra.mxu0 0.0
    %1067 = vmatprep.subr.mxu0 0.0
    %1068 = vmatpush1.msra.mxu0 0.0
    %1069 = vmatprep.subr.mxu0 0.0
    %1070 = vmatpush1.msra.mxu0 0.0
    %1071 = vmatprep.subr.mxu0 0.0
    %1072 = vmatpush1.msra.mxu0 0.0
    %1073 = vmatprep.subr.mxu0 0.0
    %1074 = vmatpush1.msra.mxu0 0.0
    %1075 = vmatprep.subr.mxu0 0.0
    %1076 = vmatpush1.msra.mxu0 0.0
    %1077 = vmatprep.subr.mxu0 0.0
    %1078 = vmatpush1.msra.mxu0 0.0
    %1079 = vmatprep.subr.mxu0 0.0
    %1080 = vmatpush1.msra.mxu0 0.0
    %1081 = vmatprep.subr.mxu0 0.0
    %1082 = vmatpush1.msra.mxu0 0.0
    %1083 = vmatprep.mubr.f32.mxu0 0.0
    %1084 = vmatmul.mubr.f32.gmra.mrb[0].mxu0 %v877
    %v1085 = vpop.f32.mrb[0].mxu0
    %v1086 = vadd.f32 %v1001, %v1085
    %v1087 = vpop.f32.mrb[0].mxu0
    %1088 = vmatprep.mubr.f32.mxu0 0.0
    %1089 = vmatmul.mubr.f32.gmra.mrb[0].mxu0 %v878
    %v1090 = vpop.f32.mrb[0].mxu0
    %v1091 = vadd.f32 %v1006, %v1090
    %v1092 = vpop.f32.mrb[0].mxu0
    %1093 = vmatprep.mubr.f32.mxu0 0.0
    %1094 = vmatmul.mubr.f32.gmra.mrb[0].mxu0 %v879
    %v1095 = vpop.f32.mrb[0].mxu0
    %v1096 = vadd.f32 %v1011, %v1095
    %v1097 = vpop.f32.mrb[0].mxu0
    %1098 = vmatprep.mubr.f32.mxu0 0.0
    %1099 = vmatmul.mubr.f32.gmra.mrb[0].mxu0 %v880
    %v1100 = vpop.f32.mrb[0].mxu0
    %v1101 = vadd.f32 %v1016, %v1100
    %v1102 = vpop.f32.mrb[0].mxu0
    %1103 = vdwg.mxu0
    %v1104 = vmax.f32 %v1086, 0.0
    %v1105 = vmax.f32 %v1091, 0.0
    %v1106 = vmax.f32 %v1096, 0.0
    %v1107 = vmax.f32 %v1101, 0.0
    %v1108 = vrot.slane %v1104, 7
    %v1109 = vrot.slane %v1105, 7
    %v1110 = vrot.slane %v1106, 7
    %v1111 = vrot.slane %v1107, 7
    %v1112 = vsel %vm125, %v1110, %v1111
    %v1113 = vsel %vm125, %v1109, %v1110
    %v1114 = vsel %vm125, %v1108, %v1109
    %v1115 = vsel %vm125, %v1111, %v1108
    %v1116 = vsel %vm134, %v1115, 0.0
    %v1117 = vsel %vm135, %v1114, 0.0
    %v1118 = vsel %vm136, %v1113, 0.0
    %v1119 = vsel %vm137, %v1112, 0.0
    %v1120 = vrot.slane %v1104, 1
    %v1121 = vrot.slane %v1105, 1
    %v1122 = vrot.slane %v1106, 1
    %v1123 = vrot.slane %v1107, 1
    %v1124 = vsel %vm146, %v1122, %v1123
    %v1125 = vsel %vm146, %v1121, %v1122
    %v1126 = vsel %vm146, %v1120, %v1121
    %v1127 = vsel %vm146, %v1123, %v1120
    %v1128 = vsel %vm155, %v1126, 0.0
    %v1129 = vsel %vm156, %v1125, 0.0
    %v1130 = vsel %vm157, %v1124, 0.0
    %v1131 = vsel %vm158, %v1127, 0.0
    %v1132 = vld [vmem:[#allocation5 + $0x580] sm:$0xff]
    %v1133 = vld [vmem:[#allocation5 + $0x588] sm:$0xff]
    %v1134 = vld [vmem:[#allocation5 + $0x590] sm:$0xff]
    %v1135 = vld [vmem:[#allocation5 + $0x598] sm:$0xff]
    %v1136 = vld [vmem:[#allocation5 + $0x5a0] sm:$0xff]
    %v1137 = vld [vmem:[#allocation5 + $0x5a8] sm:$0xff]
    %v1138 = vld [vmem:[#allocation5 + $0x5b0] sm:$0xff]
    %v1139 = vld [vmem:[#allocation5 + $0x5b8] sm:$0xff]
    %v1140 = vld [vmem:[#allocation5 + $0x5c0] sm:$0xff]
    %v1141 = vld [vmem:[#allocation5 + $0x5c8] sm:$0xff]
    %v1142 = vld [vmem:[#allocation5 + $0x5d0] sm:$0xff]
    %v1143 = vld [vmem:[#allocation5 + $0x5d8] sm:$0xff]
    %v1144 = vld [vmem:[#allocation5 + $0x5e0] sm:$0xff]
    %v1145 = vld [vmem:[#allocation5 + $0x5e8] sm:$0xff]
    %v1146 = vld [vmem:[#allocation5 + $0x5f0] sm:$0xff]
    %v1147 = vld [vmem:[#allocation5 + $0x5f8] sm:$0xff]
    %v1148 = vld [vmem:[#allocation5 + $0x600] sm:$0xff]
    %v1149 = vld [vmem:[#allocation5 + $0x608] sm:$0xff]
    %v1150 = vld [vmem:[#allocation5 + $0x610] sm:$0xff]
    %v1151 = vld [vmem:[#allocation5 + $0x618] sm:$0xff]
    %v1152 = vld [vmem:[#allocation5 + $0x620] sm:$0xff]
    %v1153 = vld [vmem:[#allocation5 + $0x628] sm:$0xff]
    %v1154 = vld [vmem:[#allocation5 + $0x630] sm:$0xff]
    %v1155 = vld [vmem:[#allocation5 + $0x638] sm:$0xff]
    %v1156 = vld [vmem:[#allocation5 + $0x640] sm:$0xff]
    %v1157 = vld [vmem:[#allocation5 + $0x648] sm:$0xff]
    %v1158 = vld [vmem:[#allocation5 + $0x650] sm:$0xff]
    %v1159 = vld [vmem:[#allocation5 + $0x658] sm:$0xff]
    %v1160 = vld [vmem:[#allocation5 + $0x660] sm:$0xff]
    %v1161 = vld [vmem:[#allocation5 + $0x668] sm:$0xff]
    %v1162 = vld [vmem:[#allocation5 + $0x670] sm:$0xff]
    %v1163 = vld [vmem:[#allocation5 + $0x678] sm:$0xff]
    %v1164 = vld [vmem:[#allocation5 + $0x680] sm:$0xff]
    %v1165 = vld [vmem:[#allocation5 + $0x688] sm:$0xff]
    %v1166 = vld [vmem:[#allocation5 + $0x690] sm:$0xff]
    %v1167 = vld [vmem:[#allocation5 + $0x698] sm:$0xff]
    %v1168 = vld [vmem:[#allocation5 + $0x6a0] sm:$0xff]
    %v1169 = vld [vmem:[#allocation5 + $0x6a8] sm:$0xff]
    %v1170 = vld [vmem:[#allocation5 + $0x6b0] sm:$0xff]
    %v1171 = vld [vmem:[#allocation5 + $0x6b8] sm:$0xff]
    %v1172 = vld [vmem:[#allocation5 + $0x6c0] sm:$0xff]
    %v1173 = vld [vmem:[#allocation5 + $0x6c8] sm:$0xff]
    %v1174 = vld [vmem:[#allocation5 + $0x6d0] sm:$0xff]
    %v1175 = vld [vmem:[#allocation5 + $0x6d8] sm:$0xff]
    %v1176 = vld [vmem:[#allocation5 + $0x6e0] sm:$0xff]
    %v1177 = vld [vmem:[#allocation5 + $0x6e8] sm:$0xff]
    %v1178 = vld [vmem:[#allocation5 + $0x6f0] sm:$0xff]
    %v1179 = vld [vmem:[#allocation5 + $0x6f8] sm:$0xff]
    %v1180 = vld [vmem:[#allocation7 + $0x28] sm:$0x1]
    %v1181 = vlaneseq
    %v1182 = vshrl.u32 %v1181, 7
    %v1183 = vsub.s32 0, %v1182
    %v1184 = vrot.slane %v1180, %v1183
    %1185 = vmatprep.subr.mxu0 0.0
    %1186 = vmatpush1.msra.mxu0 %v1132
    %1187 = vmatprep.subr.mxu0 0.0
    %1188 = vmatpush1.msra.mxu0 %v1133
    %1189 = vmatprep.subr.mxu0 0.0
    %1190 = vmatpush1.msra.mxu0 %v1134
    %1191 = vmatprep.subr.mxu0 0.0
    %1192 = vmatpush1.msra.mxu0 %v1135
    %1193 = vmatprep.subr.mxu0 0.0
    %1194 = vmatpush1.msra.mxu0 %v1136
    %1195 = vmatprep.subr.mxu0 0.0
    %1196 = vmatpush1.msra.mxu0 %v1137
    %1197 = vmatprep.subr.mxu0 0.0
    %1198 = vmatpush1.msra.mxu0 %v1138
    %1199 = vmatprep.subr.mxu0 0.0
    %1200 = vmatpush1.msra.mxu0 %v1139
    %1201 = vmatprep.subr.mxu0 0.0
    %1202 = vmatpush1.msra.mxu0 %v1140
    %1203 = vmatprep.subr.mxu0 0.0
    %1204 = vmatpush1.msra.mxu0 %v1141
    %1205 = vmatprep.subr.mxu0 0.0
    %1206 = vmatpush1.msra.mxu0 %v1142
    %1207 = vmatprep.subr.mxu0 0.0
    %1208 = vmatpush1.msra.mxu0 %v1143
    %1209 = vmatprep.subr.mxu0 0.0
    %1210 = vmatpush1.msra.mxu0 %v1144
    %1211 = vmatprep.subr.mxu0 0.0
    %1212 = vmatpush1.msra.mxu0 %v1145
    %1213 = vmatprep.subr.mxu0 0.0
    %1214 = vmatpush1.msra.mxu0 %v1146
    %1215 = vmatprep.subr.mxu0 0.0
    %1216 = vmatpush1.msra.mxu0 %v1147
    %1217 = vmatprep.subr.mxu0 0.0
    %1218 = vmatpush1.msra.mxu0 %v1148
    %1219 = vmatprep.subr.mxu0 0.0
    %1220 = vmatpush1.msra.mxu0 %v1149
    %1221 = vmatprep.subr.mxu0 0.0
    %1222 = vmatpush1.msra.mxu0 %v1150
    %1223 = vmatprep.subr.mxu0 0.0
    %1224 = vmatpush1.msra.mxu0 %v1151
    %1225 = vmatprep.subr.mxu0 0.0
    %1226 = vmatpush1.msra.mxu0 %v1152
    %1227 = vmatprep.subr.mxu0 0.0
    %1228 = vmatpush1.msra.mxu0 %v1153
    %1229 = vmatprep.subr.mxu0 0.0
    %1230 = vmatpush1.msra.mxu0 %v1154
    %1231 = vmatprep.subr.mxu0 0.0
    %1232 = vmatpush1.msra.mxu0 %v1155
    %1233 = vmatprep.subr.mxu0 0.0
    %1234 = vmatpush1.msra.mxu0 %v1156
    %1235 = vmatprep.subr.mxu0 0.0
    %1236 = vmatpush1.msra.mxu0 %v1157
    %1237 = vmatprep.subr.mxu0 0.0
    %1238 = vmatpush1.msra.mxu0 %v1158
    %1239 = vmatprep.subr.mxu0 0.0
    %1240 = vmatpush1.msra.mxu0 %v1159
    %1241 = vmatprep.subr.mxu0 0.0
    %1242 = vmatpush1.msra.mxu0 %v1160
    %1243 = vmatprep.subr.mxu0 0.0
    %1244 = vmatpush1.msra.mxu0 %v1161
    %1245 = vmatprep.subr.mxu0 0.0
    %1246 = vmatpush1.msra.mxu0 %v1162
    %1247 = vmatprep.subr.mxu0 0.0
    %1248 = vmatpush1.msra.mxu0 %v1163
    %1249 = vmatprep.mubr.f32.mxu0 %v1104
    %1250 = vmatmul.mubr.f32.gmra.mrb[0].mxu0 %v1116
    %v1251 = vpop.f32.mrb[0].mxu0
    %v1252 = vadd.f32 %v1184, %v1251
    %v1253 = vpop.f32.mrb[0].mxu0
    %1254 = vmatprep.mubr.f32.mxu0 %v1105
    %1255 = vmatmul.mubr.f32.gmra.mrb[0].mxu0 %v1117
    %v1256 = vpop.f32.mrb[0].mxu0
    %v1257 = vadd.f32 %v1184, %v1256
    %v1258 = vpop.f32.mrb[0].mxu0
    %1259 = vmatprep.mubr.f32.mxu0 %v1106
    %1260 = vmatmul.mubr.f32.gmra.mrb[0].mxu0 %v1118
    %v1261 = vpop.f32.mrb[0].mxu0
    %v1262 = vadd.f32 %v1184, %v1261
    %v1263 = vpop.f32.mrb[0].mxu0
    %1264 = vmatprep.mubr.f32.mxu0 %v1107
    %1265 = vmatmul.mubr.f32.gmra.mrb[0].mxu0 %v1119
    %v1266 = vpop.f32.mrb[0].mxu0
    %v1267 = vadd.f32 %v1184, %v1266
    %v1268 = vpop.f32.mrb[0].mxu0
    %1269 = vdwg.mxu0
    %1270 = vmatprep.subr.mxu0 0.0
    %1271 = vmatpush1.msra.mxu0 %v1164
    %1272 = vmatprep.subr.mxu0 0.0
    %1273 = vmatpush1.msra.mxu0 %v1165
    %1274 = vmatprep.subr.mxu0 0.0
    %1275 = vmatpush1.msra.mxu0 %v1166
    %1276 = vmatprep.subr.mxu0 0.0
    %1277 = vmatpush1.msra.mxu0 %v1167
    %1278 = vmatprep.subr.mxu0 0.0
    %1279 = vmatpush1.msra.mxu0 %v1168
    %1280 = vmatprep.subr.mxu0 0.0
    %1281 = vmatpush1.msra.mxu0 %v1169
    %1282 = vmatprep.subr.mxu0 0.0
    %1283 = vmatpush1.msra.mxu0 %v1170
    %1284 = vmatprep.subr.mxu0 0.0
    %1285 = vmatpush1.msra.mxu0 %v1171
    %1286 = vmatprep.subr.mxu0 0.0
    %1287 = vmatpush1.msra.mxu0 %v1172
    %1288 = vmatprep.subr.mxu0 0.0
    %1289 = vmatpush1.msra.mxu0 %v1173
    %1290 = vmatprep.subr.mxu0 0.0
    %1291 = vmatpush1.msra.mxu0 %v1174
    %1292 = vmatprep.subr.mxu0 0.0
    %1293 = vmatpush1.msra.mxu0 %v1175
    %1294 = vmatprep.subr.mxu0 0.0
    %1295 = vmatpush1.msra.mxu0 %v1176
    %1296 = vmatprep.subr.mxu0 0.0
    %1297 = vmatpush1.msra.mxu0 %v1177
    %1298 = vmatprep.subr.mxu0 0.0
    %1299 = vmatpush1.msra.mxu0 %v1178
    %1300 = vmatprep.subr.mxu0 0.0
    %1301 = vmatpush1.msra.mxu0 %v1179
    %1302 = vmatprep.subr.mxu0 0.0
    %1303 = vmatpush1.msra.mxu0 0.0
    %1304 = vmatprep.subr.mxu0 0.0
    %1305 = vmatpush1.msra.mxu0 0.0
    %1306 = vmatprep.subr.mxu0 0.0
    %1307 = vmatpush1.msra.mxu0 0.0
    %1308 = vmatprep.subr.mxu0 0.0
    %1309 = vmatpush1.msra.mxu0 0.0
    %1310 = vmatprep.subr.mxu0 0.0
    %1311 = vmatpush1.msra.mxu0 0.0
    %1312 = vmatprep.subr.mxu0 0.0
    %1313 = vmatpush1.msra.mxu0 0.0
    %1314 = vmatprep.subr.mxu0 0.0
    %1315 = vmatpush1.msra.mxu0 0.0
    %1316 = vmatprep.subr.mxu0 0.0
    %1317 = vmatpush1.msra.mxu0 0.0
    %1318 = vmatprep.subr.mxu0 0.0
    %1319 = vmatpush1.msra.mxu0 0.0
    %1320 = vmatprep.subr.mxu0 0.0
    %1321 = vmatpush1.msra.mxu0 0.0
    %1322 = vmatprep.subr.mxu0 0.0
    %1323 = vmatpush1.msra.mxu0 0.0
    %1324 = vmatprep.subr.mxu0 0.0
    %1325 = vmatpush1.msra.mxu0 0.0
    %1326 = vmatprep.subr.mxu0 0.0
    %1327 = vmatpush1.msra.mxu0 0.0
    %1328 = vmatprep.subr.mxu0 0.0
    %1329 = vmatpush1.msra.mxu0 0.0
    %1330 = vmatprep.subr.mxu0 0.0
    %1331 = vmatpush1.msra.mxu0 0.0
    %1332 = vmatprep.subr.mxu0 0.0
    %1333 = vmatpush1.msra.mxu0 0.0
    %1334 = vmatprep.mubr.f32.mxu0 0.0
    %1335 = vmatmul.mubr.f32.gmra.mrb[0].mxu0 %v1128
    %v1336 = vpop.f32.mrb[0].mxu0
    %v1337 = vadd.f32 %v1252, %v1336
    %v1338 = vpop.f32.mrb[0].mxu0
    %1339 = vmatprep.mubr.f32.mxu0 0.0
    %1340 = vmatmul.mubr.f32.gmra.mrb[0].mxu0 %v1129
    %v1341 = vpop.f32.mrb[0].mxu0
    %v1342 = vadd.f32 %v1257, %v1341
    %v1343 = vpop.f32.mrb[0].mxu0
    %1344 = vmatprep.mubr.f32.mxu0 0.0
    %1345 = vmatmul.mubr.f32.gmra.mrb[0].mxu0 %v1130
    %v1346 = vpop.f32.mrb[0].mxu0
    %v1347 = vadd.f32 %v1262, %v1346
    %v1348 = vpop.f32.mrb[0].mxu0
    %1349 = vmatprep.mubr.f32.mxu0 0.0
    %1350 = vmatmul.mubr.f32.gmra.mrb[0].mxu0 %v1131
    %v1351 = vpop.f32.mrb[0].mxu0
    %v1352 = vadd.f32 %v1267, %v1351
    %v1353 = vpop.f32.mrb[0].mxu0
    %1354 = vdwg.mxu0
    %v1355 = vadd.f32 %v1337, %v729
    %v1356 = vadd.f32 %v1342, %v734
    %v1357 = vadd.f32 %v1347, %v739
    %v1358 = vadd.f32 %v1352, %v744
    %1359 = vst [vmem:[#allocation8] sm:$0xff] %v1355
    %1360 = vst [vmem:[#allocation8 + $0x8] sm:$0xff] %v1356
    %1361 = vst [vmem:[#allocation8 + $0x10] sm:$0xff] %v1357
    %1362 = vst [vmem:[#allocation8 + $0x18] sm:$0xff] %v1358
    // Predicated region
    $region26: #{tpu_custom_call.1} parent=1 // pred_check
      _
    $region27: #{tpu_custom_call.1} parent=1 // pred_check_branch
      %1364 = sbr.rel (0) target = $region29
    $region28: #{tpu_custom_call.1} parent=1 // pred_region
      %s1366 = ssub.s32 512, 512
      %1367 = vsyncadd [#allocation4], %s1366
      %s1368 = sshll.u32 [#allocation8], 4
      %s1369 = int_to_ptr.vmem [resolvable:$true] %s1368
      %1374 = dma.vmem_to_hbm [thread:$0]  %s1369, 512, %s3, [#allocation4], 128, 128, 8
    $region29: #{tpu_custom_call.1} parent=1 // pred_fallthru
      _
    // Predicated region
    $region30: #{tpu_custom_call.1} parent=1 // pred_check
      _
    $region31: #{tpu_custom_call.1} parent=1 // pred_check_branch
      %1376 = sbr.rel (0) target = $region33
    $region32: #{tpu_custom_call.1} parent=1 // pred_region
      %1377 = dma.done [#allocation4], 512
    $region33: #{tpu_custom_call.1} parent=1 // pred_fallthru
      _
    %1378 = vsyncpa [#allocation3], 1
    %1379 = vsyncpa [#allocation6], 1
    %1380 = vsyncpa [#allocation4], 1

</llo_original>
